<compile_context>
chip_gen: v5e
topology: v5e:2x2
jax: 0.10.0
libtpu: 0.0.40
codegen_flags: <defaults>
</compile_context>

<pallas_src>
import jax
import jax.numpy as jnp
from jax import lax
from jax.experimental import pallas as pl
from jax.experimental.pallas import tpu as pltpu


# ----------------------------- model dims -----------------------------------
B = 2          # batch
S = 8          # seq_len
F = 4          # input_size
H = 32         # hidden_size
O = 1          # output_size (the 1-column output layer is done as mul+reduce)
H2 = 2 * H
H3 = 3 * H
H4 = 4 * H

# ------------------------- packed-blob row offsets ---------------------------
# Single blob, 128 columns (= 4H); row segments padded to multiples of 8.
A_WIH0 = 0      # (F, 4H)   rows 0:4   (padded to 8)     gates [i|f|o|g]
A_WHH0 = 8      # (H, 4H)   rows 8:40
A_B0 = 40       # (1, 4H)   row 40     (padded to 48)
A_W1 = 48       # (2H, 4H)  rows 48:112  stacked [W_ih1 ; W_hh1]
A_B1 = 112      # (1, 4H)   row 112    (padded to 120)
A_WPOST = 120   # (H, 4H)   rows 120:152 cols [W_attn_e | W_attn_h | W_fc_h | W_fc_c]
A_BPOST = 152   # (1, 4H)   row 152    cols [b_attn | b_fc | v | w_out]  (pad to 160)
A_BOUT = 160    # (1, 4H)   row 160    out_b broadcast over all 128 cols (pad to 168)
A_ROWS = 168


# ------------------------------ the kernel ----------------------------------
def lstm_attn_kernel(x_ref, p_ref, o_ref):
  """x_ref: (S*B, F) time-major; p_ref: (A_ROWS, 4H) packed params."""
  f32 = jnp.float32

  # ---- recurrence parameters (the only weights live across the unroll) ----
  wih0 = p_ref[A_WIH0:A_WIH0 + F, :]          # (F, 4H)
  whh0 = p_ref[A_WHH0:A_WHH0 + H, :]          # (H, 4H)
  b0 = p_ref[A_B0:A_B0 + 1, :]                # (1, 4H)
  w1 = p_ref[A_W1:A_W1 + H2, :]               # (2H, 4H)  [W_ih1 ; W_hh1]
  b1 = p_ref[A_B1:A_B1 + 1, :]                # (1, 4H)

  def cell(gates, c):
    # gate column order is [i | f | o | g] (re-packed in the wrapper):
    # one sigmoid over 3H lanes, one tanh over H lanes.
    sig = jax.nn.sigmoid(gates[:, :H3])
    g_g = jnp.tanh(gates[:, H3:])
    i_g = sig[:, 0:H]
    f_g = sig[:, H:2 * H]
    o_g = sig[:, 2 * H:H3]
    c_new = f_g * c + i_g * g_g
    h_new = o_g * jnp.tanh(c_new)
    return h_new, c_new

  # ---- hoisted layer-0 input projection: one matmul for all timesteps ----
  xproj = jnp.dot(x_ref[...], wih0, preferred_element_type=f32) + b0  # (S*B,4H)

  # ---- fused, fully-unrolled 2-layer recurrence (1 MXU push / layer / step) ----
  h0 = jnp.zeros((B, H), f32)
  c0 = jnp.zeros((B, H), f32)
  h1 = jnp.zeros((B, H), f32)
  c1 = jnp.zeros((B, H), f32)
  hs = []      # layer-1 hidden state per step (the "encoder outputs")

  for t in range(S):
    g0 = xproj[t * B:(t + 1) * B, :] + jnp.dot(
        h0, whh0, preferred_element_type=f32)
    h0, c0 = cell(g0, c0)
    # inter-layer dropout = identity (eval mode)
    h01 = jnp.concatenate([h0, h1], axis=1)                  # (B, 2H)
    g1 = jnp.dot(h01, w1, preferred_element_type=f32) + b1   # fused wih1+whh1
    h1, c1 = cell(g1, c1)
    hs.append(h1)

  h_last = h1
  hs_all = jnp.concatenate(hs, axis=0)                       # (S*B, H) time-major

  # ---- post-loop parameters (loaded AFTER the recurrence: low vreg pressure) ----
  w_post = p_ref[A_WPOST:A_WPOST + H, :]        # (H, 4H)
  bpost = p_ref[A_BPOST:A_BPOST + 1, :]         # (1, 4H)
  battn = bpost[:, 0:H]                         # (1, H)
  bfc = bpost[:, H:2 * H]                       # (1, H)
  v_row = bpost[:, 2 * H:H3]                    # (1, H)
  wout_r = bpost[:, H3:H4]                      # (1, H)
  # out_b is broadcast across the whole BOUT row, so any column is valid.
  bout = p_ref[A_BOUT:A_BOUT + 1, 0:1]          # (1, 1)
  wfc_c = w_post[:, H3:H4]                      # (H, H)  fc weight, context half

  # One fused MXU pass over the stacked encoder outputs:
  #   cols [0:H)   = enc @ W_attn_e        (needed for every step)
  #   cols [H:2H)  = enc @ W_attn_h        (only last-step rows used)
  #   cols [2H:3H) = enc @ W_fc_h          (only last-step rows used)
  P = jnp.dot(hs_all, w_post, preferred_element_type=f32)    # (S*B, 4H)
  eproj = P[:, 0:H]                                          # (S*B, H)
  hproj = P[(S - 1) * B:S * B, H:2 * H] + battn              # (B, H) = h_last@W_attn_h + b
  fc_h = P[(S - 1) * B:S * B, 2 * H:H3]                      # (B, H) = h_last@W_fc_h

  # ---- batched attention tail ----
  hrep = jnp.concatenate([hproj] * S, axis=0)                # (S*B, H)
  energy = jnp.tanh(eproj + hrep)                            # (S*B, H)
  # score_t = energy_t . v  as one multiply + one cross-lane reduction
  score_col = jnp.sum(energy * v_row, axis=-1, keepdims=True)  # (S*B, 1)
  # tiny relayout to (B, S) for the softmax over the sequence (lane) axis
  score = jnp.concatenate(
      [score_col[t * B:(t + 1) * B, :] for t in range(S)], axis=1)  # (B, S)
  m = jnp.max(score, axis=1, keepdims=True)
  e = jnp.exp(score - m)
  attn_w = e * pl.reciprocal(jnp.sum(e, axis=1, keepdims=True), approx=True)

  # context = sum_t attn_w[:, t] * hs[t]   (pairwise tree-sum of 8 terms)
  prods = [hs[t] * attn_w[:, t:t + 1] for t in range(S)]
  while len(prods) > 1:
    nxt = [prods[i] + prods[i + 1] for i in range(0, len(prods) - 1, 2)]
    if len(prods) % 2:
      nxt.append(prods[-1])
    prods = nxt
  context = prods[0]                                         # (B, H)

  # ---- head: fc(context half matmul + precomputed hidden half) -> relu ----
  fc_out = jnp.maximum(
      jnp.dot(context, wfc_c, preferred_element_type=f32) + fc_h + bfc, 0.0)
  # dropout = identity (eval mode); output layer as multiply + lane reduction
  out = jnp.sum(fc_out * wout_r, axis=-1, keepdims=True) + bout   # (B, 1)
  o_ref[...] = out.astype(o_ref.dtype)


# ------------------------------ wrapper --------------------------------------
@jax.jit
def lstm_attention_forward(x_bsf, blob):
  """x_bsf: (B, S, F) batch-first, like the PyTorch module."""
  x_flat = jnp.transpose(x_bsf, (1, 0, 2)).reshape(S * B, F)  # time-major rows

  vmem = pl.BlockSpec(memory_space=pltpu.MemorySpace.VMEM)
  return pl.pallas_call(
      lstm_attn_kernel,
      out_shape=jax.ShapeDtypeStruct((B, O), jnp.float32),
      in_specs=[vmem, vmem],
      out_specs=vmem,
  )(x_flat, blob)


# --------------------------- parameter packing -------------------------------
def _reorder_gates(w_t):
  """(in, 4H) with cols [i|f|g|o] -> [i|f|o|g] (sigmoid gates first)."""
  return jnp.concatenate(
      [w_t[:, :2 * H], w_t[:, 3 * H:], w_t[:, 2 * H:3 * H]], axis=1)


def _pad_rows(a, rows):
  return jnp.pad(a, ((0, rows - a.shape[0]), (0, 0)))


def pack_params(raw):
  """Pack raw PyTorch-layout params into one contiguous lane-dense VMEM blob."""
  wih0 = _reorder_gates(raw["w_ih0"].T)                        # (F, 4H)
  whh0 = _reorder_gates(raw["w_hh0"].T)                        # (H, 4H)
  b0 = _reorder_gates((raw["b_ih0"] + raw["b_hh0"])[None, :])  # (1, 4H)
  wih1 = _reorder_gates(raw["w_ih1"].T)                        # (H, 4H)
  whh1 = _reorder_gates(raw["w_hh1"].T)                        # (H, 4H)
  b1 = _reorder_gates((raw["b_ih1"] + raw["b_hh1"])[None, :])  # (1, 4H)
  w1 = jnp.concatenate([wih1, whh1], axis=0)                   # (2H, 4H)

  attn_w = raw["attn_w"]                    # (H, 2H): [hidden | encoder] cols
  wattn_h = attn_w[:, :H].T                 # (H, H)
  wattn_e = attn_w[:, H:].T                 # (H, H)
  fc_w = raw["fc_w"]                        # (H, 2H): [context | hidden] cols
  wfc_c = fc_w[:, :H].T
  wfc_h = fc_w[:, H:].T
  w_post = jnp.concatenate([wattn_e, wattn_h, wfc_h, wfc_c], axis=1)  # (H, 4H)

  bpost = jnp.concatenate(
      [raw["attn_b"][None, :], raw["fc_b"][None, :],
       raw["v_w"], raw["out_w"]], axis=1)                      # (1, 4H)
  bout_row = jnp.broadcast_to(raw["out_b"][None, :], (1, H4))  # (1, 4H)

  blob = jnp.concatenate([
      _pad_rows(wih0, 8), whh0, _pad_rows(b0, 8),
      w1, _pad_rows(b1, 8),
      w_post, _pad_rows(bpost, 8), _pad_rows(bout_row, 8)], axis=0)
  assert blob.shape == (A_ROWS, H4), blob.shape
  return blob


# --------------------------- parameter init ----------------------------------
def xavier_uniform(key, shape_out_in):
  fan_out, fan_in = shape_out_in
  bound = (6.0 / (fan_in + fan_out)) ** 0.5
  return jax.random.uniform(key, shape_out_in, jnp.float32, -bound, bound)


def init_raw_params(key):
  ks = jax.random.split(key, 8)
  z = lambda n: jnp.zeros((n,), jnp.float32)   # module zero-inits all biases
  return {
      "w_ih0": xavier_uniform(ks[0], (4 * H, F)),
      "w_hh0": xavier_uniform(ks[1], (4 * H, H)),
      "b_ih0": z(4 * H), "b_hh0": z(4 * H),
      "w_ih1": xavier_uniform(ks[2], (4 * H, H)),
      "w_hh1": xavier_uniform(ks[3], (4 * H, H)),
      "b_ih1": z(4 * H), "b_hh1": z(4 * H),
      "attn_w": xavier_uniform(ks[4], (H, 2 * H)), "attn_b": z(H),
      "v_w": xavier_uniform(ks[5], (1, H)),
      "fc_w": xavier_uniform(ks[6], (H, 2 * H)), "fc_b": z(H),
      "out_w": xavier_uniform(ks[7], (O, H)), "out_b": z(O),
  }


# ------------------------- pure-JAX reference --------------------------------
def reference_forward(x_bsf, p):
  """Reference in original PyTorch layout / gate order (i, f, g, o)."""
  def lstm_layer(inp, w_ih, w_hh, b):       # inp: (B, S, d)
    def step(carry, x_t):
      h, c = carry
      g = x_t @ w_ih.T + h @ w_hh.T + b
      i = jax.nn.sigmoid(g[:, :H])
      f = jax.nn.sigmoid(g[:, H:2 * H])
      gg = jnp.tanh(g[:, 2 * H:3 * H])
      o = jax.nn.sigmoid(g[:, 3 * H:])
      c = f * c + i * gg
      h = o * jnp.tanh(c)
      return (h, c), h
    (h, _), ys = lax.scan(step, (jnp.zeros((B, H)), jnp.zeros((B, H))),
                          jnp.transpose(inp, (1, 0, 2)))
    return jnp.transpose(ys, (1, 0, 2)), h

  out1, _ = lstm_layer(x_bsf, p["w_ih0"], p["w_hh0"], p["b_ih0"] + p["b_hh0"])
  out2, h_last = lstm_layer(out1, p["w_ih1"], p["w_hh1"],
                            p["b_ih1"] + p["b_hh1"])
  hid = jnp.broadcast_to(h_last[:, None, :], out2.shape)
  energy = jnp.tanh(jnp.concatenate([hid, out2], -1) @ p["attn_w"].T
                    + p["attn_b"])
  score = (energy @ p["v_w"].T)[..., 0]                    # (B, S)
  w = jax.nn.softmax(score, axis=1)
  context = jnp.einsum("bs,bsh->bh", w, out2)
  combined = jnp.concatenate([context, h_last], -1)
  fc = jnp.maximum(combined @ p["fc_w"].T + p["fc_b"], 0.0)
  return fc @ p["out_w"].T + p["out_b"]


# --------------------------------- main ---------------------------------------
if __name__ == "__main__":
  key = jax.random.PRNGKey(0)
  k_x, k_p = jax.random.split(key)
  x = jax.random.normal(k_x, (B, S, F), jnp.float32)   # (batch, seq, feat)
  raw = init_raw_params(k_p)
  blob = pack_params(raw)

  out = lstm_attention_forward(x, blob)
  jax.block_until_ready(out)
  assert out.shape == (B, O), out.shape

  ref = reference_forward(x, raw)
  # tolerance covers approx-reciprocal softmax normalization (~1e-4 relative)
  assert jnp.allclose(out, ref, atol=2e-3, rtol=2e-3), (out, ref)

  print("KERNEL_OK")
</pallas_src>

<mosaic_0001>
module attributes {stable_mosaic.version = 11 : i64} {
  func.func @lstm_attn_kernel(%arg0: memref<16x4xf32, #tpu.memory_space<vmem>>, %arg1: memref<168x128xf32, #tpu.memory_space<vmem>>, %arg2: memref<2x1xf32, #tpu.memory_space<vmem>>) attributes {dimension_semantics = [], scalar_prefetch = 0 : i64, scratch_operands = 0 : i64, tpu.core_type = #tpu.core_type<tc>} {
    %c0 = arith.constant 0 : index
    %c0_0 = arith.constant 0 : index
    %0 = vector.load %arg1[%c0, %c0_0] : memref<168x128xf32, #tpu.memory_space<vmem>>, vector<4x128xf32>
    %c8 = arith.constant 8 : index
    %c0_1 = arith.constant 0 : index
    %1 = vector.load %arg1[%c8, %c0_1] : memref<168x128xf32, #tpu.memory_space<vmem>>, vector<32x128xf32>
    %c40 = arith.constant 40 : index
    %c0_2 = arith.constant 0 : index
    %2 = vector.load %arg1[%c40, %c0_2] : memref<168x128xf32, #tpu.memory_space<vmem>>, vector<1x128xf32>
    %c48 = arith.constant 48 : index
    %c0_3 = arith.constant 0 : index
    %3 = vector.load %arg1[%c48, %c0_3] : memref<168x128xf32, #tpu.memory_space<vmem>>, vector<64x128xf32>
    %c112 = arith.constant 112 : index
    %c0_4 = arith.constant 0 : index
    %4 = vector.load %arg1[%c112, %c0_4] : memref<168x128xf32, #tpu.memory_space<vmem>>, vector<1x128xf32>
    %c0_5 = arith.constant 0 : index
    %c0_6 = arith.constant 0 : index
    %5 = vector.load %arg0[%c0_5, %c0_6] : memref<16x4xf32, #tpu.memory_space<vmem>>, vector<16x4xf32>
    %cst = arith.constant dense<0.000000e+00> : vector<16x128xf32>
    %6 = tpu.matmul %5, %0, %cst {dimension_numbers = #tpu.dot_dimension_numbers<[1], [0], [0], [1], [0, 0, 1, 1], [], []>} : vector<16x4xf32>, vector<4x128xf32>, vector<16x128xf32> -> vector<16x128xf32>
    %7 = vector.broadcast %2 : vector<1x128xf32> to vector<16x128xf32>
    %8 = arith.addf %6, %7 : vector<16x128xf32>
    %cst_7 = arith.constant 0.000000e+00 : f32
    %9 = vector.broadcast %cst_7 : f32 to vector<2x32xf32>
    %cst_8 = arith.constant 0.000000e+00 : f32
    %10 = vector.broadcast %cst_8 : f32 to vector<2x32xf32>
    %cst_9 = arith.constant 0.000000e+00 : f32
    %11 = vector.broadcast %cst_9 : f32 to vector<2x32xf32>
    %cst_10 = arith.constant 0.000000e+00 : f32
    %12 = vector.broadcast %cst_10 : f32 to vector<2x32xf32>
    %13 = vector.extract_strided_slice %8 {offsets = [0, 0], sizes = [2, 128], strides = [1, 1]} : vector<16x128xf32> to vector<2x128xf32>
    %cst_11 = arith.constant dense<0.000000e+00> : vector<2x128xf32>
    %14 = tpu.matmul %9, %1, %cst_11 {dimension_numbers = #tpu.dot_dimension_numbers<[1], [0], [0], [1], [0, 0, 1, 1], [], []>} : vector<2x32xf32>, vector<32x128xf32>, vector<2x128xf32> -> vector<2x128xf32>
    %15 = arith.addf %13, %14 : vector<2x128xf32>
    %16 = vector.extract_strided_slice %15 {offsets = [0, 0], sizes = [2, 96], strides = [1, 1]} : vector<2x128xf32> to vector<2x96xf32>
    %17 = arith.negf %16 : vector<2x96xf32>
    %18 = math.exp %17 : vector<2x96xf32>
    %cst_12 = arith.constant 1.000000e+00 : f32
    %19 = vector.broadcast %cst_12 : f32 to vector<2x96xf32>
    %20 = arith.addf %19, %18 : vector<2x96xf32>
    %21 = arith.divf %19, %20 : vector<2x96xf32>
    %22 = vector.extract_strided_slice %15 {offsets = [0, 96], sizes = [2, 32], strides = [1, 1]} : vector<2x128xf32> to vector<2x32xf32>
    %23 = math.tanh %22 : vector<2x32xf32>
    %24 = vector.extract_strided_slice %21 {offsets = [0, 0], sizes = [2, 32], strides = [1, 1]} : vector<2x96xf32> to vector<2x32xf32>
    %25 = vector.extract_strided_slice %21 {offsets = [0, 32], sizes = [2, 32], strides = [1, 1]} : vector<2x96xf32> to vector<2x32xf32>
    %26 = vector.extract_strided_slice %21 {offsets = [0, 64], sizes = [2, 32], strides = [1, 1]} : vector<2x96xf32> to vector<2x32xf32>
    %27 = arith.mulf %25, %10 : vector<2x32xf32>
    %28 = arith.mulf %24, %23 : vector<2x32xf32>
    %29 = arith.addf %27, %28 : vector<2x32xf32>
    %30 = math.tanh %29 : vector<2x32xf32>
    %31 = arith.mulf %26, %30 : vector<2x32xf32>
    %32 = tpu.concatenate %31, %11 in 1 : vector<2x32xf32>, vector<2x32xf32> -> vector<2x64xf32>
    %cst_13 = arith.constant dense<0.000000e+00> : vector<2x128xf32>
    %33 = tpu.matmul %32, %3, %cst_13 {dimension_numbers = #tpu.dot_dimension_numbers<[1], [0], [0], [1], [0, 0, 1, 1], [], []>} : vector<2x64xf32>, vector<64x128xf32>, vector<2x128xf32> -> vector<2x128xf32>
    %34 = vector.broadcast %4 : vector<1x128xf32> to vector<2x128xf32>
    %35 = arith.addf %33, %34 : vector<2x128xf32>
    %36 = vector.extract_strided_slice %35 {offsets = [0, 0], sizes = [2, 96], strides = [1, 1]} : vector<2x128xf32> to vector<2x96xf32>
    %37 = arith.negf %36 : vector<2x96xf32>
    %38 = math.exp %37 : vector<2x96xf32>
    %cst_14 = arith.constant 1.000000e+00 : f32
    %39 = vector.broadcast %cst_14 : f32 to vector<2x96xf32>
    %40 = arith.addf %39, %38 : vector<2x96xf32>
    %41 = arith.divf %39, %40 : vector<2x96xf32>
    %42 = vector.extract_strided_slice %35 {offsets = [0, 96], sizes = [2, 32], strides = [1, 1]} : vector<2x128xf32> to vector<2x32xf32>
    %43 = math.tanh %42 : vector<2x32xf32>
    %44 = vector.extract_strided_slice %41 {offsets = [0, 0], sizes = [2, 32], strides = [1, 1]} : vector<2x96xf32> to vector<2x32xf32>
    %45 = vector.extract_strided_slice %41 {offsets = [0, 32], sizes = [2, 32], strides = [1, 1]} : vector<2x96xf32> to vector<2x32xf32>
    %46 = vector.extract_strided_slice %41 {offsets = [0, 64], sizes = [2, 32], strides = [1, 1]} : vector<2x96xf32> to vector<2x32xf32>
    %47 = arith.mulf %45, %12 : vector<2x32xf32>
    %48 = arith.mulf %44, %43 : vector<2x32xf32>
    %49 = arith.addf %47, %48 : vector<2x32xf32>
    %50 = math.tanh %49 : vector<2x32xf32>
    %51 = arith.mulf %46, %50 : vector<2x32xf32>
    %52 = vector.extract_strided_slice %8 {offsets = [2, 0], sizes = [2, 128], strides = [1, 1]} : vector<16x128xf32> to vector<2x128xf32>
    %cst_15 = arith.constant dense<0.000000e+00> : vector<2x128xf32>
    %53 = tpu.matmul %31, %1, %cst_15 {dimension_numbers = #tpu.dot_dimension_numbers<[1], [0], [0], [1], [0, 0, 1, 1], [], []>} : vector<2x32xf32>, vector<32x128xf32>, vector<2x128xf32> -> vector<2x128xf32>
    %54 = arith.addf %52, %53 : vector<2x128xf32>
    %55 = vector.extract_strided_slice %54 {offsets = [0, 0], sizes = [2, 96], strides = [1, 1]} : vector<2x128xf32> to vector<2x96xf32>
    %56 = arith.negf %55 : vector<2x96xf32>
    %57 = math.exp %56 : vector<2x96xf32>
    %cst_16 = arith.constant 1.000000e+00 : f32
    %58 = vector.broadcast %cst_16 : f32 to vector<2x96xf32>
    %59 = arith.addf %58, %57 : vector<2x96xf32>
    %60 = arith.divf %58, %59 : vector<2x96xf32>
    %61 = vector.extract_strided_slice %54 {offsets = [0, 96], sizes = [2, 32], strides = [1, 1]} : vector<2x128xf32> to vector<2x32xf32>
    %62 = math.tanh %61 : vector<2x32xf32>
    %63 = vector.extract_strided_slice %60 {offsets = [0, 0], sizes = [2, 32], strides = [1, 1]} : vector<2x96xf32> to vector<2x32xf32>
    %64 = vector.extract_strided_slice %60 {offsets = [0, 32], sizes = [2, 32], strides = [1, 1]} : vector<2x96xf32> to vector<2x32xf32>
    %65 = vector.extract_strided_slice %60 {offsets = [0, 64], sizes = [2, 32], strides = [1, 1]} : vector<2x96xf32> to vector<2x32xf32>
    %66 = arith.mulf %64, %29 : vector<2x32xf32>
    %67 = arith.mulf %63, %62 : vector<2x32xf32>
    %68 = arith.addf %66, %67 : vector<2x32xf32>
    %69 = math.tanh %68 : vector<2x32xf32>
    %70 = arith.mulf %65, %69 : vector<2x32xf32>
    %71 = tpu.concatenate %70, %51 in 1 : vector<2x32xf32>, vector<2x32xf32> -> vector<2x64xf32>
    %cst_17 = arith.constant dense<0.000000e+00> : vector<2x128xf32>
    %72 = tpu.matmul %71, %3, %cst_17 {dimension_numbers = #tpu.dot_dimension_numbers<[1], [0], [0], [1], [0, 0, 1, 1], [], []>} : vector<2x64xf32>, vector<64x128xf32>, vector<2x128xf32> -> vector<2x128xf32>
    %73 = vector.broadcast %4 : vector<1x128xf32> to vector<2x128xf32>
    %74 = arith.addf %72, %73 : vector<2x128xf32>
    %75 = vector.extract_strided_slice %74 {offsets = [0, 0], sizes = [2, 96], strides = [1, 1]} : vector<2x128xf32> to vector<2x96xf32>
    %76 = arith.negf %75 : vector<2x96xf32>
    %77 = math.exp %76 : vector<2x96xf32>
    %cst_18 = arith.constant 1.000000e+00 : f32
    %78 = vector.broadcast %cst_18 : f32 to vector<2x96xf32>
    %79 = arith.addf %78, %77 : vector<2x96xf32>
    %80 = arith.divf %78, %79 : vector<2x96xf32>
    %81 = vector.extract_strided_slice %74 {offsets = [0, 96], sizes = [2, 32], strides = [1, 1]} : vector<2x128xf32> to vector<2x32xf32>
    %82 = math.tanh %81 : vector<2x32xf32>
    %83 = vector.extract_strided_slice %80 {offsets = [0, 0], sizes = [2, 32], strides = [1, 1]} : vector<2x96xf32> to vector<2x32xf32>
    %84 = vector.extract_strided_slice %80 {offsets = [0, 32], sizes = [2, 32], strides = [1, 1]} : vector<2x96xf32> to vector<2x32xf32>
    %85 = vector.extract_strided_slice %80 {offsets = [0, 64], sizes = [2, 32], strides = [1, 1]} : vector<2x96xf32> to vector<2x32xf32>
    %86 = arith.mulf %84, %49 : vector<2x32xf32>
    %87 = arith.mulf %83, %82 : vector<2x32xf32>
    %88 = arith.addf %86, %87 : vector<2x32xf32>
    %89 = math.tanh %88 : vector<2x32xf32>
    %90 = arith.mulf %85, %89 : vector<2x32xf32>
    %91 = vector.extract_strided_slice %8 {offsets = [4, 0], sizes = [2, 128], strides = [1, 1]} : vector<16x128xf32> to vector<2x128xf32>
    %cst_19 = arith.constant dense<0.000000e+00> : vector<2x128xf32>
    %92 = tpu.matmul %70, %1, %cst_19 {dimension_numbers = #tpu.dot_dimension_numbers<[1], [0], [0], [1], [0, 0, 1, 1], [], []>} : vector<2x32xf32>, vector<32x128xf32>, vector<2x128xf32> -> vector<2x128xf32>
    %93 = arith.addf %91, %92 : vector<2x128xf32>
    %94 = vector.extract_strided_slice %93 {offsets = [0, 0], sizes = [2, 96], strides = [1, 1]} : vector<2x128xf32> to vector<2x96xf32>
    %95 = arith.negf %94 : vector<2x96xf32>
    %96 = math.exp %95 : vector<2x96xf32>
    %cst_20 = arith.constant 1.000000e+00 : f32
    %97 = vector.broadcast %cst_20 : f32 to vector<2x96xf32>
    %98 = arith.addf %97, %96 : vector<2x96xf32>
    %99 = arith.divf %97, %98 : vector<2x96xf32>
    %100 = vector.extract_strided_slice %93 {offsets = [0, 96], sizes = [2, 32], strides = [1, 1]} : vector<2x128xf32> to vector<2x32xf32>
    %101 = math.tanh %100 : vector<2x32xf32>
    %102 = vector.extract_strided_slice %99 {offsets = [0, 0], sizes = [2, 32], strides = [1, 1]} : vector<2x96xf32> to vector<2x32xf32>
    %103 = vector.extract_strided_slice %99 {offsets = [0, 32], sizes = [2, 32], strides = [1, 1]} : vector<2x96xf32> to vector<2x32xf32>
    %104 = vector.extract_strided_slice %99 {offsets = [0, 64], sizes = [2, 32], strides = [1, 1]} : vector<2x96xf32> to vector<2x32xf32>
    %105 = arith.mulf %103, %68 : vector<2x32xf32>
    %106 = arith.mulf %102, %101 : vector<2x32xf32>
    %107 = arith.addf %105, %106 : vector<2x32xf32>
    %108 = math.tanh %107 : vector<2x32xf32>
    %109 = arith.mulf %104, %108 : vector<2x32xf32>
    %110 = tpu.concatenate %109, %90 in 1 : vector<2x32xf32>, vector<2x32xf32> -> vector<2x64xf32>
    %cst_21 = arith.constant dense<0.000000e+00> : vector<2x128xf32>
    %111 = tpu.matmul %110, %3, %cst_21 {dimension_numbers = #tpu.dot_dimension_numbers<[1], [0], [0], [1], [0, 0, 1, 1], [], []>} : vector<2x64xf32>, vector<64x128xf32>, vector<2x128xf32> -> vector<2x128xf32>
    %112 = vector.broadcast %4 : vector<1x128xf32> to vector<2x128xf32>
    %113 = arith.addf %111, %112 : vector<2x128xf32>
    %114 = vector.extract_strided_slice %113 {offsets = [0, 0], sizes = [2, 96], strides = [1, 1]} : vector<2x128xf32> to vector<2x96xf32>
    %115 = arith.negf %114 : vector<2x96xf32>
    %116 = math.exp %115 : vector<2x96xf32>
    %cst_22 = arith.constant 1.000000e+00 : f32
    %117 = vector.broadcast %cst_22 : f32 to vector<2x96xf32>
    %118 = arith.addf %117, %116 : vector<2x96xf32>
    %119 = arith.divf %117, %118 : vector<2x96xf32>
    %120 = vector.extract_strided_slice %113 {offsets = [0, 96], sizes = [2, 32], strides = [1, 1]} : vector<2x128xf32> to vector<2x32xf32>
    %121 = math.tanh %120 : vector<2x32xf32>
    %122 = vector.extract_strided_slice %119 {offsets = [0, 0], sizes = [2, 32], strides = [1, 1]} : vector<2x96xf32> to vector<2x32xf32>
    %123 = vector.extract_strided_slice %119 {offsets = [0, 32], sizes = [2, 32], strides = [1, 1]} : vector<2x96xf32> to vector<2x32xf32>
    %124 = vector.extract_strided_slice %119 {offsets = [0, 64], sizes = [2, 32], strides = [1, 1]} : vector<2x96xf32> to vector<2x32xf32>
    %125 = arith.mulf %123, %88 : vector<2x32xf32>
    %126 = arith.mulf %122, %121 : vector<2x32xf32>
    %127 = arith.addf %125, %126 : vector<2x32xf32>
    %128 = math.tanh %127 : vector<2x32xf32>
    %129 = arith.mulf %124, %128 : vector<2x32xf32>
    %130 = vector.extract_strided_slice %8 {offsets = [6, 0], sizes = [2, 128], strides = [1, 1]} : vector<16x128xf32> to vector<2x128xf32>
    %cst_23 = arith.constant dense<0.000000e+00> : vector<2x128xf32>
    %131 = tpu.matmul %109, %1, %cst_23 {dimension_numbers = #tpu.dot_dimension_numbers<[1], [0], [0], [1], [0, 0, 1, 1], [], []>} : vector<2x32xf32>, vector<32x128xf32>, vector<2x128xf32> -> vector<2x128xf32>
    %132 = arith.addf %130, %131 : vector<2x128xf32>
    %133 = vector.extract_strided_slice %132 {offsets = [0, 0], sizes = [2, 96], strides = [1, 1]} : vector<2x128xf32> to vector<2x96xf32>
    %134 = arith.negf %133 : vector<2x96xf32>
    %135 = math.exp %134 : vector<2x96xf32>
    %cst_24 = arith.constant 1.000000e+00 : f32
    %136 = vector.broadcast %cst_24 : f32 to vector<2x96xf32>
    %137 = arith.addf %136, %135 : vector<2x96xf32>
    %138 = arith.divf %136, %137 : vector<2x96xf32>
    %139 = vector.extract_strided_slice %132 {offsets = [0, 96], sizes = [2, 32], strides = [1, 1]} : vector<2x128xf32> to vector<2x32xf32>
    %140 = math.tanh %139 : vector<2x32xf32>
    %141 = vector.extract_strided_slice %138 {offsets = [0, 0], sizes = [2, 32], strides = [1, 1]} : vector<2x96xf32> to vector<2x32xf32>
    %142 = vector.extract_strided_slice %138 {offsets = [0, 32], sizes = [2, 32], strides = [1, 1]} : vector<2x96xf32> to vector<2x32xf32>
    %143 = vector.extract_strided_slice %138 {offsets = [0, 64], sizes = [2, 32], strides = [1, 1]} : vector<2x96xf32> to vector<2x32xf32>
    %144 = arith.mulf %142, %107 : vector<2x32xf32>
    %145 = arith.mulf %141, %140 : vector<2x32xf32>
    %146 = arith.addf %144, %145 : vector<2x32xf32>
    %147 = math.tanh %146 : vector<2x32xf32>
    %148 = arith.mulf %143, %147 : vector<2x32xf32>
    %149 = tpu.concatenate %148, %129 in 1 : vector<2x32xf32>, vector<2x32xf32> -> vector<2x64xf32>
    %cst_25 = arith.constant dense<0.000000e+00> : vector<2x128xf32>
    %150 = tpu.matmul %149, %3, %cst_25 {dimension_numbers = #tpu.dot_dimension_numbers<[1], [0], [0], [1], [0, 0, 1, 1], [], []>} : vector<2x64xf32>, vector<64x128xf32>, vector<2x128xf32> -> vector<2x128xf32>
    %151 = vector.broadcast %4 : vector<1x128xf32> to vector<2x128xf32>
    %152 = arith.addf %150, %151 : vector<2x128xf32>
    %153 = vector.extract_strided_slice %152 {offsets = [0, 0], sizes = [2, 96], strides = [1, 1]} : vector<2x128xf32> to vector<2x96xf32>
    %154 = arith.negf %153 : vector<2x96xf32>
    %155 = math.exp %154 : vector<2x96xf32>
    %cst_26 = arith.constant 1.000000e+00 : f32
    %156 = vector.broadcast %cst_26 : f32 to vector<2x96xf32>
    %157 = arith.addf %156, %155 : vector<2x96xf32>
    %158 = arith.divf %156, %157 : vector<2x96xf32>
    %159 = vector.extract_strided_slice %152 {offsets = [0, 96], sizes = [2, 32], strides = [1, 1]} : vector<2x128xf32> to vector<2x32xf32>
    %160 = math.tanh %159 : vector<2x32xf32>
    %161 = vector.extract_strided_slice %158 {offsets = [0, 0], sizes = [2, 32], strides = [1, 1]} : vector<2x96xf32> to vector<2x32xf32>
    %162 = vector.extract_strided_slice %158 {offsets = [0, 32], sizes = [2, 32], strides = [1, 1]} : vector<2x96xf32> to vector<2x32xf32>
    %163 = vector.extract_strided_slice %158 {offsets = [0, 64], sizes = [2, 32], strides = [1, 1]} : vector<2x96xf32> to vector<2x32xf32>
    %164 = arith.mulf %162, %127 : vector<2x32xf32>
    %165 = arith.mulf %161, %160 : vector<2x32xf32>
    %166 = arith.addf %164, %165 : vector<2x32xf32>
    %167 = math.tanh %166 : vector<2x32xf32>
    %168 = arith.mulf %163, %167 : vector<2x32xf32>
    %169 = vector.extract_strided_slice %8 {offsets = [8, 0], sizes = [2, 128], strides = [1, 1]} : vector<16x128xf32> to vector<2x128xf32>
    %cst_27 = arith.constant dense<0.000000e+00> : vector<2x128xf32>
    %170 = tpu.matmul %148, %1, %cst_27 {dimension_numbers = #tpu.dot_dimension_numbers<[1], [0], [0], [1], [0, 0, 1, 1], [], []>} : vector<2x32xf32>, vector<32x128xf32>, vector<2x128xf32> -> vector<2x128xf32>
    %171 = arith.addf %169, %170 : vector<2x128xf32>
    %172 = vector.extract_strided_slice %171 {offsets = [0, 0], sizes = [2, 96], strides = [1, 1]} : vector<2x128xf32> to vector<2x96xf32>
    %173 = arith.negf %172 : vector<2x96xf32>
    %174 = math.exp %173 : vector<2x96xf32>
    %cst_28 = arith.constant 1.000000e+00 : f32
    %175 = vector.broadcast %cst_28 : f32 to vector<2x96xf32>
    %176 = arith.addf %175, %174 : vector<2x96xf32>
    %177 = arith.divf %175, %176 : vector<2x96xf32>
    %178 = vector.extract_strided_slice %171 {offsets = [0, 96], sizes = [2, 32], strides = [1, 1]} : vector<2x128xf32> to vector<2x32xf32>
    %179 = math.tanh %178 : vector<2x32xf32>
    %180 = vector.extract_strided_slice %177 {offsets = [0, 0], sizes = [2, 32], strides = [1, 1]} : vector<2x96xf32> to vector<2x32xf32>
    %181 = vector.extract_strided_slice %177 {offsets = [0, 32], sizes = [2, 32], strides = [1, 1]} : vector<2x96xf32> to vector<2x32xf32>
    %182 = vector.extract_strided_slice %177 {offsets = [0, 64], sizes = [2, 32], strides = [1, 1]} : vector<2x96xf32> to vector<2x32xf32>
    %183 = arith.mulf %181, %146 : vector<2x32xf32>
    %184 = arith.mulf %180, %179 : vector<2x32xf32>
    %185 = arith.addf %183, %184 : vector<2x32xf32>
    %186 = math.tanh %185 : vector<2x32xf32>
    %187 = arith.mulf %182, %186 : vector<2x32xf32>
    %188 = tpu.concatenate %187, %168 in 1 : vector<2x32xf32>, vector<2x32xf32> -> vector<2x64xf32>
    %cst_29 = arith.constant dense<0.000000e+00> : vector<2x128xf32>
    %189 = tpu.matmul %188, %3, %cst_29 {dimension_numbers = #tpu.dot_dimension_numbers<[1], [0], [0], [1], [0, 0, 1, 1], [], []>} : vector<2x64xf32>, vector<64x128xf32>, vector<2x128xf32> -> vector<2x128xf32>
    %190 = vector.broadcast %4 : vector<1x128xf32> to vector<2x128xf32>
    %191 = arith.addf %189, %190 : vector<2x128xf32>
    %192 = vector.extract_strided_slice %191 {offsets = [0, 0], sizes = [2, 96], strides = [1, 1]} : vector<2x128xf32> to vector<2x96xf32>
    %193 = arith.negf %192 : vector<2x96xf32>
    %194 = math.exp %193 : vector<2x96xf32>
    %cst_30 = arith.constant 1.000000e+00 : f32
    %195 = vector.broadcast %cst_30 : f32 to vector<2x96xf32>
    %196 = arith.addf %195, %194 : vector<2x96xf32>
    %197 = arith.divf %195, %196 : vector<2x96xf32>
    %198 = vector.extract_strided_slice %191 {offsets = [0, 96], sizes = [2, 32], strides = [1, 1]} : vector<2x128xf32> to vector<2x32xf32>
    %199 = math.tanh %198 : vector<2x32xf32>
    %200 = vector.extract_strided_slice %197 {offsets = [0, 0], sizes = [2, 32], strides = [1, 1]} : vector<2x96xf32> to vector<2x32xf32>
    %201 = vector.extract_strided_slice %197 {offsets = [0, 32], sizes = [2, 32], strides = [1, 1]} : vector<2x96xf32> to vector<2x32xf32>
    %202 = vector.extract_strided_slice %197 {offsets = [0, 64], sizes = [2, 32], strides = [1, 1]} : vector<2x96xf32> to vector<2x32xf32>
    %203 = arith.mulf %201, %166 : vector<2x32xf32>
    %204 = arith.mulf %200, %199 : vector<2x32xf32>
    %205 = arith.addf %203, %204 : vector<2x32xf32>
    %206 = math.tanh %205 : vector<2x32xf32>
    %207 = arith.mulf %202, %206 : vector<2x32xf32>
    %208 = vector.extract_strided_slice %8 {offsets = [10, 0], sizes = [2, 128], strides = [1, 1]} : vector<16x128xf32> to vector<2x128xf32>
    %cst_31 = arith.constant dense<0.000000e+00> : vector<2x128xf32>
    %209 = tpu.matmul %187, %1, %cst_31 {dimension_numbers = #tpu.dot_dimension_numbers<[1], [0], [0], [1], [0, 0, 1, 1], [], []>} : vector<2x32xf32>, vector<32x128xf32>, vector<2x128xf32> -> vector<2x128xf32>
    %210 = arith.addf %208, %209 : vector<2x128xf32>
    %211 = vector.extract_strided_slice %210 {offsets = [0, 0], sizes = [2, 96], strides = [1, 1]} : vector<2x128xf32> to vector<2x96xf32>
    %212 = arith.negf %211 : vector<2x96xf32>
    %213 = math.exp %212 : vector<2x96xf32>
    %cst_32 = arith.constant 1.000000e+00 : f32
    %214 = vector.broadcast %cst_32 : f32 to vector<2x96xf32>
    %215 = arith.addf %214, %213 : vector<2x96xf32>
    %216 = arith.divf %214, %215 : vector<2x96xf32>
    %217 = vector.extract_strided_slice %210 {offsets = [0, 96], sizes = [2, 32], strides = [1, 1]} : vector<2x128xf32> to vector<2x32xf32>
    %218 = math.tanh %217 : vector<2x32xf32>
    %219 = vector.extract_strided_slice %216 {offsets = [0, 0], sizes = [2, 32], strides = [1, 1]} : vector<2x96xf32> to vector<2x32xf32>
    %220 = vector.extract_strided_slice %216 {offsets = [0, 32], sizes = [2, 32], strides = [1, 1]} : vector<2x96xf32> to vector<2x32xf32>
    %221 = vector.extract_strided_slice %216 {offsets = [0, 64], sizes = [2, 32], strides = [1, 1]} : vector<2x96xf32> to vector<2x32xf32>
    %222 = arith.mulf %220, %185 : vector<2x32xf32>
    %223 = arith.mulf %219, %218 : vector<2x32xf32>
    %224 = arith.addf %222, %223 : vector<2x32xf32>
    %225 = math.tanh %224 : vector<2x32xf32>
    %226 = arith.mulf %221, %225 : vector<2x32xf32>
    %227 = tpu.concatenate %226, %207 in 1 : vector<2x32xf32>, vector<2x32xf32> -> vector<2x64xf32>
    %cst_33 = arith.constant dense<0.000000e+00> : vector<2x128xf32>
    %228 = tpu.matmul %227, %3, %cst_33 {dimension_numbers = #tpu.dot_dimension_numbers<[1], [0], [0], [1], [0, 0, 1, 1], [], []>} : vector<2x64xf32>, vector<64x128xf32>, vector<2x128xf32> -> vector<2x128xf32>
    %229 = vector.broadcast %4 : vector<1x128xf32> to vector<2x128xf32>
    %230 = arith.addf %228, %229 : vector<2x128xf32>
    %231 = vector.extract_strided_slice %230 {offsets = [0, 0], sizes = [2, 96], strides = [1, 1]} : vector<2x128xf32> to vector<2x96xf32>
    %232 = arith.negf %231 : vector<2x96xf32>
    %233 = math.exp %232 : vector<2x96xf32>
    %cst_34 = arith.constant 1.000000e+00 : f32
    %234 = vector.broadcast %cst_34 : f32 to vector<2x96xf32>
    %235 = arith.addf %234, %233 : vector<2x96xf32>
    %236 = arith.divf %234, %235 : vector<2x96xf32>
    %237 = vector.extract_strided_slice %230 {offsets = [0, 96], sizes = [2, 32], strides = [1, 1]} : vector<2x128xf32> to vector<2x32xf32>
    %238 = math.tanh %237 : vector<2x32xf32>
    %239 = vector.extract_strided_slice %236 {offsets = [0, 0], sizes = [2, 32], strides = [1, 1]} : vector<2x96xf32> to vector<2x32xf32>
    %240 = vector.extract_strided_slice %236 {offsets = [0, 32], sizes = [2, 32], strides = [1, 1]} : vector<2x96xf32> to vector<2x32xf32>
    %241 = vector.extract_strided_slice %236 {offsets = [0, 64], sizes = [2, 32], strides = [1, 1]} : vector<2x96xf32> to vector<2x32xf32>
    %242 = arith.mulf %240, %205 : vector<2x32xf32>
    %243 = arith.mulf %239, %238 : vector<2x32xf32>
    %244 = arith.addf %242, %243 : vector<2x32xf32>
    %245 = math.tanh %244 : vector<2x32xf32>
    %246 = arith.mulf %241, %245 : vector<2x32xf32>
    %247 = vector.extract_strided_slice %8 {offsets = [12, 0], sizes = [2, 128], strides = [1, 1]} : vector<16x128xf32> to vector<2x128xf32>
    %cst_35 = arith.constant dense<0.000000e+00> : vector<2x128xf32>
    %248 = tpu.matmul %226, %1, %cst_35 {dimension_numbers = #tpu.dot_dimension_numbers<[1], [0], [0], [1], [0, 0, 1, 1], [], []>} : vector<2x32xf32>, vector<32x128xf32>, vector<2x128xf32> -> vector<2x128xf32>
    %249 = arith.addf %247, %248 : vector<2x128xf32>
    %250 = vector.extract_strided_slice %249 {offsets = [0, 0], sizes = [2, 96], strides = [1, 1]} : vector<2x128xf32> to vector<2x96xf32>
    %251 = arith.negf %250 : vector<2x96xf32>
    %252 = math.exp %251 : vector<2x96xf32>
    %cst_36 = arith.constant 1.000000e+00 : f32
    %253 = vector.broadcast %cst_36 : f32 to vector<2x96xf32>
    %254 = arith.addf %253, %252 : vector<2x96xf32>
    %255 = arith.divf %253, %254 : vector<2x96xf32>
    %256 = vector.extract_strided_slice %249 {offsets = [0, 96], sizes = [2, 32], strides = [1, 1]} : vector<2x128xf32> to vector<2x32xf32>
    %257 = math.tanh %256 : vector<2x32xf32>
    %258 = vector.extract_strided_slice %255 {offsets = [0, 0], sizes = [2, 32], strides = [1, 1]} : vector<2x96xf32> to vector<2x32xf32>
    %259 = vector.extract_strided_slice %255 {offsets = [0, 32], sizes = [2, 32], strides = [1, 1]} : vector<2x96xf32> to vector<2x32xf32>
    %260 = vector.extract_strided_slice %255 {offsets = [0, 64], sizes = [2, 32], strides = [1, 1]} : vector<2x96xf32> to vector<2x32xf32>
    %261 = arith.mulf %259, %224 : vector<2x32xf32>
    %262 = arith.mulf %258, %257 : vector<2x32xf32>
    %263 = arith.addf %261, %262 : vector<2x32xf32>
    %264 = math.tanh %263 : vector<2x32xf32>
    %265 = arith.mulf %260, %264 : vector<2x32xf32>
    %266 = tpu.concatenate %265, %246 in 1 : vector<2x32xf32>, vector<2x32xf32> -> vector<2x64xf32>
    %cst_37 = arith.constant dense<0.000000e+00> : vector<2x128xf32>
    %267 = tpu.matmul %266, %3, %cst_37 {dimension_numbers = #tpu.dot_dimension_numbers<[1], [0], [0], [1], [0, 0, 1, 1], [], []>} : vector<2x64xf32>, vector<64x128xf32>, vector<2x128xf32> -> vector<2x128xf32>
    %268 = vector.broadcast %4 : vector<1x128xf32> to vector<2x128xf32>
    %269 = arith.addf %267, %268 : vector<2x128xf32>
    %270 = vector.extract_strided_slice %269 {offsets = [0, 0], sizes = [2, 96], strides = [1, 1]} : vector<2x128xf32> to vector<2x96xf32>
    %271 = arith.negf %270 : vector<2x96xf32>
    %272 = math.exp %271 : vector<2x96xf32>
    %cst_38 = arith.constant 1.000000e+00 : f32
    %273 = vector.broadcast %cst_38 : f32 to vector<2x96xf32>
    %274 = arith.addf %273, %272 : vector<2x96xf32>
    %275 = arith.divf %273, %274 : vector<2x96xf32>
    %276 = vector.extract_strided_slice %269 {offsets = [0, 96], sizes = [2, 32], strides = [1, 1]} : vector<2x128xf32> to vector<2x32xf32>
    %277 = math.tanh %276 : vector<2x32xf32>
    %278 = vector.extract_strided_slice %275 {offsets = [0, 0], sizes = [2, 32], strides = [1, 1]} : vector<2x96xf32> to vector<2x32xf32>
    %279 = vector.extract_strided_slice %275 {offsets = [0, 32], sizes = [2, 32], strides = [1, 1]} : vector<2x96xf32> to vector<2x32xf32>
    %280 = vector.extract_strided_slice %275 {offsets = [0, 64], sizes = [2, 32], strides = [1, 1]} : vector<2x96xf32> to vector<2x32xf32>
    %281 = arith.mulf %279, %244 : vector<2x32xf32>
    %282 = arith.mulf %278, %277 : vector<2x32xf32>
    %283 = arith.addf %281, %282 : vector<2x32xf32>
    %284 = math.tanh %283 : vector<2x32xf32>
    %285 = arith.mulf %280, %284 : vector<2x32xf32>
    %286 = vector.extract_strided_slice %8 {offsets = [14, 0], sizes = [2, 128], strides = [1, 1]} : vector<16x128xf32> to vector<2x128xf32>
    %cst_39 = arith.constant dense<0.000000e+00> : vector<2x128xf32>
    %287 = tpu.matmul %265, %1, %cst_39 {dimension_numbers = #tpu.dot_dimension_numbers<[1], [0], [0], [1], [0, 0, 1, 1], [], []>} : vector<2x32xf32>, vector<32x128xf32>, vector<2x128xf32> -> vector<2x128xf32>
    %288 = arith.addf %286, %287 : vector<2x128xf32>
    %289 = vector.extract_strided_slice %288 {offsets = [0, 0], sizes = [2, 96], strides = [1, 1]} : vector<2x128xf32> to vector<2x96xf32>
    %290 = arith.negf %289 : vector<2x96xf32>
    %291 = math.exp %290 : vector<2x96xf32>
    %cst_40 = arith.constant 1.000000e+00 : f32
    %292 = vector.broadcast %cst_40 : f32 to vector<2x96xf32>
    %293 = arith.addf %292, %291 : vector<2x96xf32>
    %294 = arith.divf %292, %293 : vector<2x96xf32>
    %295 = vector.extract_strided_slice %288 {offsets = [0, 96], sizes = [2, 32], strides = [1, 1]} : vector<2x128xf32> to vector<2x32xf32>
    %296 = math.tanh %295 : vector<2x32xf32>
    %297 = vector.extract_strided_slice %294 {offsets = [0, 0], sizes = [2, 32], strides = [1, 1]} : vector<2x96xf32> to vector<2x32xf32>
    %298 = vector.extract_strided_slice %294 {offsets = [0, 32], sizes = [2, 32], strides = [1, 1]} : vector<2x96xf32> to vector<2x32xf32>
    %299 = vector.extract_strided_slice %294 {offsets = [0, 64], sizes = [2, 32], strides = [1, 1]} : vector<2x96xf32> to vector<2x32xf32>
    %300 = arith.mulf %298, %263 : vector<2x32xf32>
    %301 = arith.mulf %297, %296 : vector<2x32xf32>
    %302 = arith.addf %300, %301 : vector<2x32xf32>
    %303 = math.tanh %302 : vector<2x32xf32>
    %304 = arith.mulf %299, %303 : vector<2x32xf32>
    %305 = tpu.concatenate %304, %285 in 1 : vector<2x32xf32>, vector<2x32xf32> -> vector<2x64xf32>
    %cst_41 = arith.constant dense<0.000000e+00> : vector<2x128xf32>
    %306 = tpu.matmul %305, %3, %cst_41 {dimension_numbers = #tpu.dot_dimension_numbers<[1], [0], [0], [1], [0, 0, 1, 1], [], []>} : vector<2x64xf32>, vector<64x128xf32>, vector<2x128xf32> -> vector<2x128xf32>
    %307 = vector.broadcast %4 : vector<1x128xf32> to vector<2x128xf32>
    %308 = arith.addf %306, %307 : vector<2x128xf32>
    %309 = vector.extract_strided_slice %308 {offsets = [0, 0], sizes = [2, 96], strides = [1, 1]} : vector<2x128xf32> to vector<2x96xf32>
    %310 = arith.negf %309 : vector<2x96xf32>
    %311 = math.exp %310 : vector<2x96xf32>
    %cst_42 = arith.constant 1.000000e+00 : f32
    %312 = vector.broadcast %cst_42 : f32 to vector<2x96xf32>
    %313 = arith.addf %312, %311 : vector<2x96xf32>
    %314 = arith.divf %312, %313 : vector<2x96xf32>
    %315 = vector.extract_strided_slice %308 {offsets = [0, 96], sizes = [2, 32], strides = [1, 1]} : vector<2x128xf32> to vector<2x32xf32>
    %316 = math.tanh %315 : vector<2x32xf32>
    %317 = vector.extract_strided_slice %314 {offsets = [0, 0], sizes = [2, 32], strides = [1, 1]} : vector<2x96xf32> to vector<2x32xf32>
    %318 = vector.extract_strided_slice %314 {offsets = [0, 32], sizes = [2, 32], strides = [1, 1]} : vector<2x96xf32> to vector<2x32xf32>
    %319 = vector.extract_strided_slice %314 {offsets = [0, 64], sizes = [2, 32], strides = [1, 1]} : vector<2x96xf32> to vector<2x32xf32>
    %320 = arith.mulf %318, %283 : vector<2x32xf32>
    %321 = arith.mulf %317, %316 : vector<2x32xf32>
    %322 = arith.addf %320, %321 : vector<2x32xf32>
    %323 = math.tanh %322 : vector<2x32xf32>
    %324 = arith.mulf %319, %323 : vector<2x32xf32>
    %325 = tpu.concatenate %51, %90, %129, %168, %207, %246, %285, %324 in 0 : vector<2x32xf32>, vector<2x32xf32>, vector<2x32xf32>, vector<2x32xf32>, vector<2x32xf32>, vector<2x32xf32>, vector<2x32xf32>, vector<2x32xf32> -> vector<16x32xf32>
    %c120 = arith.constant 120 : index
    %c0_43 = arith.constant 0 : index
    %326 = vector.load %arg1[%c120, %c0_43] : memref<168x128xf32, #tpu.memory_space<vmem>>, vector<32x128xf32>
    %c152 = arith.constant 152 : index
    %c0_44 = arith.constant 0 : index
    %327 = vector.load %arg1[%c152, %c0_44] : memref<168x128xf32, #tpu.memory_space<vmem>>, vector<1x128xf32>
    %328 = vector.extract_strided_slice %327 {offsets = [0, 0], sizes = [1, 32], strides = [1, 1]} : vector<1x128xf32> to vector<1x32xf32>
    %329 = vector.extract_strided_slice %327 {offsets = [0, 32], sizes = [1, 32], strides = [1, 1]} : vector<1x128xf32> to vector<1x32xf32>
    %330 = vector.extract_strided_slice %327 {offsets = [0, 64], sizes = [1, 32], strides = [1, 1]} : vector<1x128xf32> to vector<1x32xf32>
    %331 = vector.extract_strided_slice %327 {offsets = [0, 96], sizes = [1, 32], strides = [1, 1]} : vector<1x128xf32> to vector<1x32xf32>
    %c160 = arith.constant 160 : index
    %c0_45 = arith.constant 0 : index
    %332 = vector.load %arg1[%c160, %c0_45] : memref<168x128xf32, #tpu.memory_space<vmem>>, vector<1x1xf32>
    %333 = vector.extract_strided_slice %326 {offsets = [0, 96], sizes = [32, 32], strides = [1, 1]} : vector<32x128xf32> to vector<32x32xf32>
    %cst_46 = arith.constant dense<0.000000e+00> : vector<16x128xf32>
    %334 = tpu.matmul %325, %326, %cst_46 {dimension_numbers = #tpu.dot_dimension_numbers<[1], [0], [0], [1], [0, 0, 1, 1], [], []>} : vector<16x32xf32>, vector<32x128xf32>, vector<16x128xf32> -> vector<16x128xf32>
    %335 = vector.extract_strided_slice %334 {offsets = [0, 0], sizes = [16, 32], strides = [1, 1]} : vector<16x128xf32> to vector<16x32xf32>
    %336 = vector.extract_strided_slice %334 {offsets = [14, 32], sizes = [2, 32], strides = [1, 1]} : vector<16x128xf32> to vector<2x32xf32>
    %337 = vector.broadcast %328 : vector<1x32xf32> to vector<2x32xf32>
    %338 = arith.addf %336, %337 : vector<2x32xf32>
    %339 = vector.extract_strided_slice %334 {offsets = [14, 64], sizes = [2, 32], strides = [1, 1]} : vector<16x128xf32> to vector<2x32xf32>
    %340 = tpu.concatenate %338, %338, %338, %338, %338, %338, %338, %338 in 0 : vector<2x32xf32>, vector<2x32xf32>, vector<2x32xf32>, vector<2x32xf32>, vector<2x32xf32>, vector<2x32xf32>, vector<2x32xf32>, vector<2x32xf32> -> vector<16x32xf32>
    %341 = arith.addf %335, %340 : vector<16x32xf32>
    %342 = math.tanh %341 : vector<16x32xf32>
    %343 = vector.broadcast %330 : vector<1x32xf32> to vector<16x32xf32>
    %344 = arith.mulf %342, %343 : vector<16x32xf32>
    %cst_47 = arith.constant dense<0.000000e+00> : vector<16xf32>
    %345 = vector.multi_reduction <add>, %344, %cst_47 [1] : vector<16x32xf32> to vector<16xf32>
    %346 = vector.shape_cast %345 : vector<16xf32> to vector<16x1xf32>
    %347 = vector.extract_strided_slice %346 {offsets = [0, 0], sizes = [2, 1], strides = [1, 1]} : vector<16x1xf32> to vector<2x1xf32>
    %348 = vector.extract_strided_slice %346 {offsets = [2, 0], sizes = [2, 1], strides = [1, 1]} : vector<16x1xf32> to vector<2x1xf32>
    %349 = vector.extract_strided_slice %346 {offsets = [4, 0], sizes = [2, 1], strides = [1, 1]} : vector<16x1xf32> to vector<2x1xf32>
    %350 = vector.extract_strided_slice %346 {offsets = [6, 0], sizes = [2, 1], strides = [1, 1]} : vector<16x1xf32> to vector<2x1xf32>
    %351 = vector.extract_strided_slice %346 {offsets = [8, 0], sizes = [2, 1], strides = [1, 1]} : vector<16x1xf32> to vector<2x1xf32>
    %352 = vector.extract_strided_slice %346 {offsets = [10, 0], sizes = [2, 1], strides = [1, 1]} : vector<16x1xf32> to vector<2x1xf32>
    %353 = vector.extract_strided_slice %346 {offsets = [12, 0], sizes = [2, 1], strides = [1, 1]} : vector<16x1xf32> to vector<2x1xf32>
    %354 = vector.extract_strided_slice %346 {offsets = [14, 0], sizes = [2, 1], strides = [1, 1]} : vector<16x1xf32> to vector<2x1xf32>
    %355 = tpu.concatenate %347, %348, %349, %350, %351, %352, %353, %354 in 1 : vector<2x1xf32>, vector<2x1xf32>, vector<2x1xf32>, vector<2x1xf32>, vector<2x1xf32>, vector<2x1xf32>, vector<2x1xf32>, vector<2x1xf32> -> vector<2x8xf32>
    %cst_48 = arith.constant dense<0xFF800000> : vector<2xf32>
    %356 = vector.multi_reduction <maximumf>, %355, %cst_48 [1] : vector<2x8xf32> to vector<2xf32>
    %357 = vector.shape_cast %356 : vector<2xf32> to vector<2x1xf32>
    %358 = vector.broadcast %357 : vector<2x1xf32> to vector<2x8xf32>
    %359 = arith.subf %355, %358 : vector<2x8xf32>
    %360 = math.exp %359 : vector<2x8xf32>
    %cst_49 = arith.constant dense<0.000000e+00> : vector<2xf32>
    %361 = vector.multi_reduction <add>, %360, %cst_49 [1] : vector<2x8xf32> to vector<2xf32>
    %362 = vector.shape_cast %361 : vector<2xf32> to vector<2x1xf32>
    %363 = tpu.reciprocal %362 {approx = true} : vector<2x1xf32> -> vector<2x1xf32>
    %364 = vector.broadcast %363 : vector<2x1xf32> to vector<2x8xf32>
    %365 = arith.mulf %360, %364 : vector<2x8xf32>
    %366 = vector.extract_strided_slice %365 {offsets = [0, 0], sizes = [2, 1], strides = [1, 1]} : vector<2x8xf32> to vector<2x1xf32>
    %367 = vector.broadcast %366 : vector<2x1xf32> to vector<2x32xf32>
    %368 = arith.mulf %51, %367 : vector<2x32xf32>
    %369 = vector.extract_strided_slice %365 {offsets = [0, 1], sizes = [2, 1], strides = [1, 1]} : vector<2x8xf32> to vector<2x1xf32>
    %370 = vector.broadcast %369 : vector<2x1xf32> to vector<2x32xf32>
    %371 = arith.mulf %90, %370 : vector<2x32xf32>
    %372 = vector.extract_strided_slice %365 {offsets = [0, 2], sizes = [2, 1], strides = [1, 1]} : vector<2x8xf32> to vector<2x1xf32>
    %373 = vector.broadcast %372 : vector<2x1xf32> to vector<2x32xf32>
    %374 = arith.mulf %129, %373 : vector<2x32xf32>
    %375 = vector.extract_strided_slice %365 {offsets = [0, 3], sizes = [2, 1], strides = [1, 1]} : vector<2x8xf32> to vector<2x1xf32>
    %376 = vector.broadcast %375 : vector<2x1xf32> to vector<2x32xf32>
    %377 = arith.mulf %168, %376 : vector<2x32xf32>
    %378 = vector.extract_strided_slice %365 {offsets = [0, 4], sizes = [2, 1], strides = [1, 1]} : vector<2x8xf32> to vector<2x1xf32>
    %379 = vector.broadcast %378 : vector<2x1xf32> to vector<2x32xf32>
    %380 = arith.mulf %207, %379 : vector<2x32xf32>
    %381 = vector.extract_strided_slice %365 {offsets = [0, 5], sizes = [2, 1], strides = [1, 1]} : vector<2x8xf32> to vector<2x1xf32>
    %382 = vector.broadcast %381 : vector<2x1xf32> to vector<2x32xf32>
    %383 = arith.mulf %246, %382 : vector<2x32xf32>
    %384 = vector.extract_strided_slice %365 {offsets = [0, 6], sizes = [2, 1], strides = [1, 1]} : vector<2x8xf32> to vector<2x1xf32>
    %385 = vector.broadcast %384 : vector<2x1xf32> to vector<2x32xf32>
    %386 = arith.mulf %285, %385 : vector<2x32xf32>
    %387 = vector.extract_strided_slice %365 {offsets = [0, 7], sizes = [2, 1], strides = [1, 1]} : vector<2x8xf32> to vector<2x1xf32>
    %388 = vector.broadcast %387 : vector<2x1xf32> to vector<2x32xf32>
    %389 = arith.mulf %324, %388 : vector<2x32xf32>
    %390 = arith.addf %368, %371 : vector<2x32xf32>
    %391 = arith.addf %374, %377 : vector<2x32xf32>
    %392 = arith.addf %380, %383 : vector<2x32xf32>
    %393 = arith.addf %386, %389 : vector<2x32xf32>
    %394 = arith.addf %390, %391 : vector<2x32xf32>
    %395 = arith.addf %392, %393 : vector<2x32xf32>
    %396 = arith.addf %394, %395 : vector<2x32xf32>
    %cst_50 = arith.constant dense<0.000000e+00> : vector<2x32xf32>
    %397 = tpu.matmul %396, %333, %cst_50 {dimension_numbers = #tpu.dot_dimension_numbers<[1], [0], [0], [1], [0, 0, 1, 1], [], []>} : vector<2x32xf32>, vector<32x32xf32>, vector<2x32xf32> -> vector<2x32xf32>
    %398 = arith.addf %397, %339 : vector<2x32xf32>
    %399 = vector.broadcast %329 : vector<1x32xf32> to vector<2x32xf32>
    %400 = arith.addf %398, %399 : vector<2x32xf32>
    %cst_51 = arith.constant 0.000000e+00 : f32
    %401 = vector.broadcast %cst_51 : f32 to vector<2x32xf32>
    %402 = arith.maximumf %400, %401 : vector<2x32xf32>
    %403 = vector.broadcast %331 : vector<1x32xf32> to vector<2x32xf32>
    %404 = arith.mulf %402, %403 : vector<2x32xf32>
    %cst_52 = arith.constant dense<0.000000e+00> : vector<2xf32>
    %405 = vector.multi_reduction <add>, %404, %cst_52 [1] : vector<2x32xf32> to vector<2xf32>
    %406 = vector.shape_cast %405 : vector<2xf32> to vector<2x1xf32>
    %407 = vector.broadcast %332 : vector<1x1xf32> to vector<2x1xf32>
    %408 = arith.addf %406, %407 : vector<2x1xf32>
    %c0_53 = arith.constant 0 : index
    %c0_54 = arith.constant 0 : index
    %409 = vector.load %arg2[%c0_53, %c0_54] : memref<2x1xf32, #tpu.memory_space<vmem>>, vector<2x1xf32>
    tpu.vector_store %arg2[%c0_53, %c0_54], %408 {strides = array<i32>} : memref<2x1xf32, #tpu.memory_space<vmem>>, vector<2x1xf32>,
    return
  }
}

</mosaic_0001>

<llo_original>
// kernel: lstm_attention_forward.1
$region0: #{lstm_attention_forward.1}
  #allocation0 [shape = 'u32[]', space=smem, size = 0x4, offset = 0x4, fixed_abs, tag = 'smem constant byte address 0x4 - core index']
  #allocation1 [shape = 'u32[72,128]{1,0:T(1,128)}', space=vmem, size = 0x9000, scoped, tag = 'internal scratch']
  %s0 = inlined_call_operand.vmem [shape: f32[16,4], index: 0, kind: input, shape index: {}]
  %s1 = inlined_call_operand.hbm [shape: f32[168,128], index: 1, kind: input, shape index: {}]
  %s2 = inlined_call_operand.vmem [shape: f32[2,1], index: 2, kind: output, shape index: {}]
  %s3 = sld [smem:[#allocation0]]
  $region22: #{lstm_attention_forward.1} parent=0
    _
  %s5 = ssub.s32 1, %s3
  %s6 = scalar_select 0, %s5, %s3
  $region1: #{lstm_attention_forward.1} parent=0
    #allocation2 [shape = 'u8[86016]{0}', space=vmem, size = 0x15000, scoped, tag = 'input window, operand 1, single buffered']
    #allocation3 [shape = 's32[1]{0}', space=sflag, size = 0x4, scoped, tag = 'scoped memory for lstm_attention_forward.1']
    %7 = vsyncpa [#allocation3], 0
    // Predicated region
    $region2: #{lstm_attention_forward.1} parent=1 // pred_check
      _
    $region3: #{lstm_attention_forward.1} parent=1 // pred_check_branch
      %9 = sbr.rel (0) target = $region5
    $region4: #{lstm_attention_forward.1} parent=1 // pred_region
      _
    $region5: #{lstm_attention_forward.1} parent=1 // pred_fallthru
      _
    // Predicated region
    $region6: #{lstm_attention_forward.1} parent=1 // pred_check
      _
    $region7: #{lstm_attention_forward.1} parent=1 // pred_check_branch
      %11 = sbr.rel (0) target = $region9
    $region8: #{lstm_attention_forward.1} parent=1 // pred_region
      %13 = vsyncadd [#allocation3], 0
      %s14 = sshll.u32 %s1, 4
      %s15 = int_to_ptr.hbm [resolvable:$true] %s14
      %s16 = sshll.u32 [#allocation2], 4
      %s17 = int_to_ptr.vmem [resolvable:$true] %s16
      %22 = dma.hbm_to_vmem [thread:$0]  %s15, 2688, %s17, [#allocation3], 128, 128, 8
    $region9: #{lstm_attention_forward.1} parent=1 // pred_fallthru
      _
    // Predicated region
    $region10: #{lstm_attention_forward.1} parent=1 // pred_check
      _
    $region11: #{lstm_attention_forward.1} parent=1 // pred_check_branch
      %24 = sbr.rel (0) target = $region13
    $region12: #{lstm_attention_forward.1} parent=1 // pred_region
      %26 = dma.done [#allocation3], 2688
    $region13: #{lstm_attention_forward.1} parent=1 // pred_fallthru
      _
    %v27 = vld [vmem:[#allocation2] sm:$0xf]
    %v28 = vld [vmem:[#allocation2 + $0x8] sm:$0xff]
    %v29 = vld [vmem:[#allocation2 + $0x10] sm:$0xff]
    %v30 = vld [vmem:[#allocation2 + $0x18] sm:$0xff]
    %v31 = vld [vmem:[#allocation2 + $0x20] sm:$0xff]
    %v32 = vld [vmem:[#allocation2 + $0x28] sm:$0x1]
    %v33 = vld [vmem:[#allocation2 + $0x30] sm:$0xff]
    %v34 = vld [vmem:[#allocation2 + $0x38] sm:$0xff]
    %v35 = vld [vmem:[#allocation2 + $0x40] sm:$0xff]
    %v36 = vld [vmem:[#allocation2 + $0x48] sm:$0xff]
    %v37 = vld [vmem:[#allocation2 + $0x50] sm:$0xff]
    %v38 = vld [vmem:[#allocation2 + $0x58] sm:$0xff]
    %v39 = vld [vmem:[#allocation2 + $0x60] sm:$0xff]
    %v40 = vld [vmem:[#allocation2 + $0x68] sm:$0xff]
    %v41 = vld [vmem:[#allocation2 + $0x70] sm:$0x1]
    %v42 = vld [vmem:[%s0] sm:$0xff]
    %v43 = vld [vmem:[%s0 + $0x8] sm:$0xff]
    %v44 = vperm.slane %v32, 0
    %vm45 = vcmask 31744
    %v47 = vsel %vm45, %v42, 0
    %v50 = vsel %vm45, %v43, 0
    %vm52 = vcmask 1043456
    %v54 = vsel %vm52, %v27, 0
    %56 = vmatpush.msra.mxu0 0.0
    %57 = vmatpush.msra.mxu0 0.0
    %58 = vmatpush.msra.mxu0 0.0
    %59 = vmatpush.msra.mxu0 0.0
    %60 = vmatpush.msra.mxu0 0.0
    %61 = vmatpush.msra.mxu0 0.0
    %62 = vmatpush.msra.mxu0 0.0
    %63 = vmatpush.msra.mxu0 0.0
    %64 = vmatpush.msra.mxu0 0.0
    %65 = vmatpush.msra.mxu0 0.0
    %66 = vmatpush.msra.mxu0 0.0
    %67 = vmatpush.msra.mxu0 0.0
    %68 = vmatpush.msra.mxu0 0.0
    %69 = vmatpush.msra.mxu0 0.0
    %70 = vmatpush.msra.mxu0 0.0
    %71 = vmatpush.msra.mxu0 %v54
    %72 = vmatmul.f32.gmra.mxu0 %v47
    %v73 = vpop.f32.mrf.mxu0
    %v74 = vadd.f32 %v44, %v73
    %75 = vmatmul.f32.gmra.mxu0 %v50
    %v76 = vpop.f32.mrf.mxu0
    %v77 = vadd.f32 %v44, %v76
    %78 = vdwg.mxu0
    %vm79 = vcmask 261120
    %v81 = vsel %vm79, 0.0, 0
    %83 = vmatpush.msra.mxu0 0.0
    %84 = vmatpush.msra.mxu0 0.0
    %85 = vmatpush.msra.mxu0 0.0
    %86 = vmatpush.msra.mxu0 0.0
    %87 = vmatpush.msra.mxu0 0.0
    %88 = vmatpush.msra.mxu0 0.0
    %89 = vmatpush.msra.mxu0 0.0
    %90 = vmatpush.msra.mxu0 0.0
    %91 = vmatpush.msra.mxu0 0.0
    %92 = vmatpush.msra.mxu0 0.0
    %93 = vmatpush.msra.mxu0 0.0
    %94 = vmatpush.msra.mxu0 0.0
    %95 = vmatpush.msra.mxu0 %v31
    %96 = vmatpush.msra.mxu0 %v30
    %97 = vmatpush.msra.mxu0 %v29
    %98 = vmatpush.msra.mxu0 %v28
    %99 = vmatmul.f32.gmra.mxu0 %v81
    %v100 = vpop.f32.mrf.mxu0
    %v101 = vadd.f32 0.0, %v100
    %102 = vdwg.mxu0
    %v103 = vadd.f32 %v74, %v101
    %v104 = vxor.u32 %v103, 2147483648
    %v105 = vmul.f32 %v104, 1.442695
    %v106 = vpow.pop %v105
    %v107 = vadd.f32 %v106, 1.0
    %v108 = vrcp.pop %v107
    %v109 = vmul.f32 %v107, %v108
    %v110 = vsub.f32 1.0, %v109
    %v111 = vmul.f32 %v108, %v110
    %v112 = vadd.f32 %v108, %v111
    %vm113 = vweird.f32 %v107
    %vm114 = vweird.f32 %v108
    %vm115 = vmor %vm113, %vm114
    %v116 = vsel %vm115, %v108, %v112
    %v117 = vand.u32 2147483647, %v107
    %vm118 = vcmp.eq.f32.partialorder %v117, 8.507059e+37
    %v119 = vand.u32 %v107, 2147483648
    %v120 = vor.u32 1.1754944e-38, %v119
    %v121 = vsel %vm118, %v120, %v116
    %v122 = vmul.f32 1.0, %v121
    %v123 = vtanh.pop %v103
    %v124 = vmul.f32 %v122, 0.0
    %126 = vrot.lane.b32.xlu0 %v123, 32
    %v127 = vpop.permute.xlu0 %126
    %v129 = vmul.f32 %v122, %v127
    %131 = vrot.lane.b32.xlu0 %v129, 32
    %v132 = vpop.permute.xlu0 %131
    %v134 = vadd.f32 %v124, %v132
    %v135 = vtanh.pop %v134
    %137 = vrot.lane.b32.xlu0 %v135, 32
    %v138 = vpop.permute.xlu0 %137
    %v140 = vmul.f32 %v122, %v138
    %142 = vrot.lane.b32.xlu0 %v140, 64
    %v143 = vpop.permute.xlu0 %142
    %v145 = vsel %vm79, %v143, 0.0
    %v146 = vperm.slane %v41, 0
    %vm147 = vcmask 523264
    %v149 = vsel %vm147, %v145, 0
    %151 = vmatpush.msra.mxu0 0.0
    %152 = vmatpush.msra.mxu0 0.0
    %153 = vmatpush.msra.mxu0 0.0
    %154 = vmatpush.msra.mxu0 0.0
    %155 = vmatpush.msra.mxu0 0.0
    %156 = vmatpush.msra.mxu0 0.0
    %157 = vmatpush.msra.mxu0 0.0
    %158 = vmatpush.msra.mxu0 0.0
    %159 = vmatpush.msra.mxu0 %v40
    %160 = vmatpush.msra.mxu0 %v39
    %161 = vmatpush.msra.mxu0 %v38
    %162 = vmatpush.msra.mxu0 %v37
    %163 = vmatpush.msra.mxu0 %v36
    %164 = vmatpush.msra.mxu0 %v35
    %165 = vmatpush.msra.mxu0 %v34
    %166 = vmatpush.msra.mxu0 %v33
    %167 = vmatmul.f32.gmra.mxu0 %v149
    %v168 = vpop.f32.mrf.mxu0
    %v169 = vadd.f32 %v146, %v168
    %170 = vdwg.mxu0
    %v171 = vxor.u32 %v169, 2147483648
    %v172 = vmul.f32 %v171, 1.442695
    %v173 = vpow.pop %v172
    %v174 = vadd.f32 %v173, 1.0
    %v175 = vrcp.pop %v174
    %v176 = vmul.f32 %v174, %v175
    %v177 = vsub.f32 1.0, %v176
    %v178 = vmul.f32 %v175, %v177
    %v179 = vadd.f32 %v175, %v178
    %vm180 = vweird.f32 %v174
    %vm181 = vweird.f32 %v175
    %vm182 = vmor %vm180, %vm181
    %v183 = vsel %vm182, %v175, %v179
    %v184 = vand.u32 2147483647, %v174
    %vm185 = vcmp.eq.f32.partialorder %v184, 8.507059e+37
    %v186 = vand.u32 %v174, 2147483648
    %v187 = vor.u32 1.1754944e-38, %v186
    %v188 = vsel %vm185, %v187, %v183
    %v189 = vmul.f32 1.0, %v188
    %v190 = vtanh.pop %v169
    %v191 = vmul.f32 %v189, 0.0
    %193 = vrot.lane.b32.xlu0 %v190, 32
    %v194 = vpop.permute.xlu0 %193
    %v196 = vmul.f32 %v189, %v194
    %198 = vrot.lane.b32.xlu0 %v196, 32
    %v199 = vpop.permute.xlu0 %198
    %v201 = vadd.f32 %v191, %v199
    %v202 = vtanh.pop %v201
    %204 = vrot.lane.b32.xlu0 %v202, 32
    %v205 = vpop.permute.xlu0 %204
    %v207 = vmul.f32 %v189, %v205
    %v208 = vsel %vm79, %v143, 0
    %210 = vmatpush.msra.mxu0 0.0
    %211 = vmatpush.msra.mxu0 0.0
    %212 = vmatpush.msra.mxu0 0.0
    %213 = vmatpush.msra.mxu0 0.0
    %214 = vmatpush.msra.mxu0 0.0
    %215 = vmatpush.msra.mxu0 0.0
    %216 = vmatpush.msra.mxu0 0.0
    %217 = vmatpush.msra.mxu0 0.0
    %218 = vmatpush.msra.mxu0 0.0
    %219 = vmatpush.msra.mxu0 0.0
    %220 = vmatpush.msra.mxu0 0.0
    %221 = vmatpush.msra.mxu0 0.0
    %222 = vmatpush.msra.mxu0 %v31
    %223 = vmatpush.msra.mxu0 %v30
    %224 = vmatpush.msra.mxu0 %v29
    %225 = vmatpush.msra.mxu0 %v28
    %226 = vmatmul.f32.gmra.mxu0 %v208
    %v227 = vpop.f32.mrf.mxu0
    %v228 = vadd.f32 0.0, %v227
    %229 = vdwg.mxu0
    %v231 = vrot.slane %v228, 6
    %v233 = vadd.f32 %v74, %v231
    %v234 = vxor.u32 %v233, 2147483648
    %v235 = vmul.f32 %v234, 1.442695
    %v236 = vpow.pop %v235
    %v237 = vadd.f32 %v236, 1.0
    %v238 = vrcp.pop %v237
    %v239 = vmul.f32 %v237, %v238
    %v240 = vsub.f32 1.0, %v239
    %v241 = vmul.f32 %v238, %v240
    %v242 = vadd.f32 %v238, %v241
    %vm243 = vweird.f32 %v237
    %vm244 = vweird.f32 %v238
    %vm245 = vmor %vm243, %vm244
    %v246 = vsel %vm245, %v238, %v242
    %v247 = vand.u32 2147483647, %v237
    %vm248 = vcmp.eq.f32.partialorder %v247, 8.507059e+37
    %v249 = vand.u32 %v237, 2147483648
    %v250 = vor.u32 1.1754944e-38, %v249
    %v251 = vsel %vm248, %v250, %v246
    %v252 = vmul.f32 1.0, %v251
    %v253 = vtanh.pop %v233
    %v255 = vrot.slane %v134, 6
    %v257 = vmul.f32 %v252, %v255
    %259 = vrot.lane.b32.xlu0 %v253, 32
    %v260 = vpop.permute.xlu0 %259
    %v262 = vmul.f32 %v252, %v260
    %264 = vrot.lane.b32.xlu0 %v262, 32
    %v265 = vpop.permute.xlu0 %264
    %v267 = vadd.f32 %v257, %v265
    %v268 = vtanh.pop %v267
    %270 = vrot.lane.b32.xlu0 %v268, 32
    %v271 = vpop.permute.xlu0 %270
    %v273 = vmul.f32 %v252, %v271
    %275 = vrot.lane.b32.xlu0 %v273, 64
    %v276 = vpop.permute.xlu0 %275
    %v279 = vrot.slane %v207, 6
    %280 = vrot.lane.b32.xlu0 %v279, 96
    %v281 = vpop.permute.xlu0 %280
    %v283 = vsel %vm79, %v276, %v281
    %v285 = vrot.slane %v283, 2
    %v286 = vsel %vm147, %v285, 0
    %288 = vmatpush.msra.mxu0 0.0
    %289 = vmatpush.msra.mxu0 0.0
    %290 = vmatpush.msra.mxu0 0.0
    %291 = vmatpush.msra.mxu0 0.0
    %292 = vmatpush.msra.mxu0 0.0
    %293 = vmatpush.msra.mxu0 0.0
    %294 = vmatpush.msra.mxu0 0.0
    %295 = vmatpush.msra.mxu0 0.0
    %296 = vmatpush.msra.mxu0 %v40
    %297 = vmatpush.msra.mxu0 %v39
    %298 = vmatpush.msra.mxu0 %v38
    %299 = vmatpush.msra.mxu0 %v37
    %300 = vmatpush.msra.mxu0 %v36
    %301 = vmatpush.msra.mxu0 %v35
    %302 = vmatpush.msra.mxu0 %v34
    %303 = vmatpush.msra.mxu0 %v33
    %304 = vmatmul.f32.gmra.mxu0 %v286
    %v305 = vpop.f32.mrf.mxu0
    %v306 = vadd.f32 %v146, %v305
    %307 = vdwg.mxu0
    %v308 = vxor.u32 %v306, 2147483648
    %v309 = vmul.f32 %v308, 1.442695
    %v310 = vpow.pop %v309
    %v311 = vadd.f32 %v310, 1.0
    %v312 = vrcp.pop %v311
    %v313 = vmul.f32 %v311, %v312
    %v314 = vsub.f32 1.0, %v313
    %v315 = vmul.f32 %v312, %v314
    %v316 = vadd.f32 %v312, %v315
    %vm317 = vweird.f32 %v311
    %vm318 = vweird.f32 %v312
    %vm319 = vmor %vm317, %vm318
    %v320 = vsel %vm319, %v312, %v316
    %v321 = vand.u32 2147483647, %v311
    %vm322 = vcmp.eq.f32.partialorder %v321, 8.507059e+37
    %v323 = vand.u32 %v311, 2147483648
    %v324 = vor.u32 1.1754944e-38, %v323
    %v325 = vsel %vm322, %v324, %v320
    %v326 = vmul.f32 1.0, %v325
    %v327 = vtanh.pop %v306
    %v328 = vmul.f32 %v326, %v201
    %330 = vrot.lane.b32.xlu0 %v327, 32
    %v331 = vpop.permute.xlu0 %330
    %v333 = vmul.f32 %v326, %v331
    %335 = vrot.lane.b32.xlu0 %v333, 32
    %v336 = vpop.permute.xlu0 %335
    %v338 = vadd.f32 %v328, %v336
    %v339 = vtanh.pop %v338
    %341 = vrot.lane.b32.xlu0 %v339, 32
    %v342 = vpop.permute.xlu0 %341
    %v344 = vmul.f32 %v326, %v342
    %v345 = vrot.slane %v273, 2
    %346 = vrot.lane.b32.xlu0 %v345, 64
    %v347 = vpop.permute.xlu0 %346
    %v348 = vsel %vm79, %v347, 0
    %350 = vmatpush.msra.mxu0 0.0
    %351 = vmatpush.msra.mxu0 0.0
    %352 = vmatpush.msra.mxu0 0.0
    %353 = vmatpush.msra.mxu0 0.0
    %354 = vmatpush.msra.mxu0 0.0
    %355 = vmatpush.msra.mxu0 0.0
    %356 = vmatpush.msra.mxu0 0.0
    %357 = vmatpush.msra.mxu0 0.0
    %358 = vmatpush.msra.mxu0 0.0
    %359 = vmatpush.msra.mxu0 0.0
    %360 = vmatpush.msra.mxu0 0.0
    %361 = vmatpush.msra.mxu0 0.0
    %362 = vmatpush.msra.mxu0 %v31
    %363 = vmatpush.msra.mxu0 %v30
    %364 = vmatpush.msra.mxu0 %v29
    %365 = vmatpush.msra.mxu0 %v28
    %366 = vmatmul.f32.gmra.mxu0 %v348
    %v367 = vpop.f32.mrf.mxu0
    %v368 = vadd.f32 0.0, %v367
    %369 = vdwg.mxu0
    %v371 = vrot.slane %v368, 4
    %v373 = vadd.f32 %v74, %v371
    %v374 = vxor.u32 %v373, 2147483648
    %v375 = vmul.f32 %v374, 1.442695
    %v376 = vpow.pop %v375
    %v377 = vadd.f32 %v376, 1.0
    %v378 = vrcp.pop %v377
    %v379 = vmul.f32 %v377, %v378
    %v380 = vsub.f32 1.0, %v379
    %v381 = vmul.f32 %v378, %v380
    %v382 = vadd.f32 %v378, %v381
    %vm383 = vweird.f32 %v377
    %vm384 = vweird.f32 %v378
    %vm385 = vmor %vm383, %vm384
    %v386 = vsel %vm385, %v378, %v382
    %v387 = vand.u32 2147483647, %v377
    %vm388 = vcmp.eq.f32.partialorder %v387, 8.507059e+37
    %v389 = vand.u32 %v377, 2147483648
    %v390 = vor.u32 1.1754944e-38, %v389
    %v391 = vsel %vm388, %v390, %v386
    %v392 = vmul.f32 1.0, %v391
    %v393 = vtanh.pop %v373
    %v395 = vrot.slane %v267, 6
    %v397 = vmul.f32 %v392, %v395
    %399 = vrot.lane.b32.xlu0 %v393, 32
    %v400 = vpop.permute.xlu0 %399
    %v402 = vmul.f32 %v392, %v400
    %404 = vrot.lane.b32.xlu0 %v402, 32
    %v405 = vpop.permute.xlu0 %404
    %v407 = vadd.f32 %v397, %v405
    %v408 = vtanh.pop %v407
    %410 = vrot.lane.b32.xlu0 %v408, 32
    %v411 = vpop.permute.xlu0 %410
    %v413 = vmul.f32 %v392, %v411
    %415 = vrot.lane.b32.xlu0 %v413, 64
    %v416 = vpop.permute.xlu0 %415
    %v419 = vrot.slane %v344, 4
    %420 = vrot.lane.b32.xlu0 %v419, 96
    %v421 = vpop.permute.xlu0 %420
    %v423 = vsel %vm79, %v416, %v421
    %v425 = vrot.slane %v423, 4
    %v426 = vsel %vm147, %v425, 0
    %428 = vmatpush.msra.mxu0 0.0
    %429 = vmatpush.msra.mxu0 0.0
    %430 = vmatpush.msra.mxu0 0.0
    %431 = vmatpush.msra.mxu0 0.0
    %432 = vmatpush.msra.mxu0 0.0
    %433 = vmatpush.msra.mxu0 0.0
    %434 = vmatpush.msra.mxu0 0.0
    %435 = vmatpush.msra.mxu0 0.0
    %436 = vmatpush.msra.mxu0 %v40
    %437 = vmatpush.msra.mxu0 %v39
    %438 = vmatpush.msra.mxu0 %v38
    %439 = vmatpush.msra.mxu0 %v37
    %440 = vmatpush.msra.mxu0 %v36
    %441 = vmatpush.msra.mxu0 %v35
    %442 = vmatpush.msra.mxu0 %v34
    %443 = vmatpush.msra.mxu0 %v33
    %444 = vmatmul.f32.gmra.mxu0 %v426
    %v445 = vpop.f32.mrf.mxu0
    %v446 = vadd.f32 %v146, %v445
    %447 = vdwg.mxu0
    %v448 = vxor.u32 %v446, 2147483648
    %v449 = vmul.f32 %v448, 1.442695
    %v450 = vpow.pop %v449
    %v451 = vadd.f32 %v450, 1.0
    %v452 = vrcp.pop %v451
    %v453 = vmul.f32 %v451, %v452
    %v454 = vsub.f32 1.0, %v453
    %v455 = vmul.f32 %v452, %v454
    %v456 = vadd.f32 %v452, %v455
    %vm457 = vweird.f32 %v451
    %vm458 = vweird.f32 %v452
    %vm459 = vmor %vm457, %vm458
    %v460 = vsel %vm459, %v452, %v456
    %v461 = vand.u32 2147483647, %v451
    %vm462 = vcmp.eq.f32.partialorder %v461, 8.507059e+37
    %v463 = vand.u32 %v451, 2147483648
    %v464 = vor.u32 1.1754944e-38, %v463
    %v465 = vsel %vm462, %v464, %v460
    %v466 = vmul.f32 1.0, %v465
    %v467 = vtanh.pop %v446
    %v468 = vmul.f32 %v466, %v338
    %470 = vrot.lane.b32.xlu0 %v467, 32
    %v471 = vpop.permute.xlu0 %470
    %v473 = vmul.f32 %v466, %v471
    %475 = vrot.lane.b32.xlu0 %v473, 32
    %v476 = vpop.permute.xlu0 %475
    %v478 = vadd.f32 %v468, %v476
    %v479 = vtanh.pop %v478
    %481 = vrot.lane.b32.xlu0 %v479, 32
    %v482 = vpop.permute.xlu0 %481
    %v484 = vmul.f32 %v466, %v482
    %v485 = vrot.slane %v413, 4
    %486 = vrot.lane.b32.xlu0 %v485, 64
    %v487 = vpop.permute.xlu0 %486
    %v488 = vsel %vm79, %v487, 0
    %490 = vmatpush.msra.mxu0 0.0
    %491 = vmatpush.msra.mxu0 0.0
    %492 = vmatpush.msra.mxu0 0.0
    %493 = vmatpush.msra.mxu0 0.0
    %494 = vmatpush.msra.mxu0 0.0
    %495 = vmatpush.msra.mxu0 0.0
    %496 = vmatpush.msra.mxu0 0.0
    %497 = vmatpush.msra.mxu0 0.0
    %498 = vmatpush.msra.mxu0 0.0
    %499 = vmatpush.msra.mxu0 0.0
    %500 = vmatpush.msra.mxu0 0.0
    %501 = vmatpush.msra.mxu0 0.0
    %502 = vmatpush.msra.mxu0 %v31
    %503 = vmatpush.msra.mxu0 %v30
    %504 = vmatpush.msra.mxu0 %v29
    %505 = vmatpush.msra.mxu0 %v28
    %506 = vmatmul.f32.gmra.mxu0 %v488
    %v507 = vpop.f32.mrf.mxu0
    %v508 = vadd.f32 0.0, %v507
    %509 = vdwg.mxu0
    %v511 = vrot.slane %v508, 2
    %v513 = vadd.f32 %v74, %v511
    %v514 = vxor.u32 %v513, 2147483648
    %v515 = vmul.f32 %v514, 1.442695
    %v516 = vpow.pop %v515
    %v517 = vadd.f32 %v516, 1.0
    %v518 = vrcp.pop %v517
    %v519 = vmul.f32 %v517, %v518
    %v520 = vsub.f32 1.0, %v519
    %v521 = vmul.f32 %v518, %v520
    %v522 = vadd.f32 %v518, %v521
    %vm523 = vweird.f32 %v517
    %vm524 = vweird.f32 %v518
    %vm525 = vmor %vm523, %vm524
    %v526 = vsel %vm525, %v518, %v522
    %v527 = vand.u32 2147483647, %v517
    %vm528 = vcmp.eq.f32.partialorder %v527, 8.507059e+37
    %v529 = vand.u32 %v517, 2147483648
    %v530 = vor.u32 1.1754944e-38, %v529
    %v531 = vsel %vm528, %v530, %v526
    %v532 = vmul.f32 1.0, %v531
    %v533 = vtanh.pop %v513
    %v535 = vrot.slane %v407, 6
    %v537 = vmul.f32 %v532, %v535
    %539 = vrot.lane.b32.xlu0 %v533, 32
    %v540 = vpop.permute.xlu0 %539
    %v542 = vmul.f32 %v532, %v540
    %544 = vrot.lane.b32.xlu0 %v542, 32
    %v545 = vpop.permute.xlu0 %544
    %v547 = vadd.f32 %v537, %v545
    %v548 = vtanh.pop %v547
    %550 = vrot.lane.b32.xlu0 %v548, 32
    %v551 = vpop.permute.xlu0 %550
    %v553 = vmul.f32 %v532, %v551
    %555 = vrot.lane.b32.xlu0 %v553, 64
    %v556 = vpop.permute.xlu0 %555
    %v559 = vrot.slane %v484, 2
    %560 = vrot.lane.b32.xlu0 %v559, 96
    %v561 = vpop.permute.xlu0 %560
    %v563 = vsel %vm79, %v556, %v561
    %v565 = vrot.slane %v563, 6
    %v566 = vsel %vm147, %v565, 0
    %568 = vmatpush.msra.mxu0 0.0
    %569 = vmatpush.msra.mxu0 0.0
    %570 = vmatpush.msra.mxu0 0.0
    %571 = vmatpush.msra.mxu0 0.0
    %572 = vmatpush.msra.mxu0 0.0
    %573 = vmatpush.msra.mxu0 0.0
    %574 = vmatpush.msra.mxu0 0.0
    %575 = vmatpush.msra.mxu0 0.0
    %576 = vmatpush.msra.mxu0 %v40
    %577 = vmatpush.msra.mxu0 %v39
    %578 = vmatpush.msra.mxu0 %v38
    %579 = vmatpush.msra.mxu0 %v37
    %580 = vmatpush.msra.mxu0 %v36
    %581 = vmatpush.msra.mxu0 %v35
    %582 = vmatpush.msra.mxu0 %v34
    %583 = vmatpush.msra.mxu0 %v33
    %584 = vmatmul.f32.gmra.mxu0 %v566
    %v585 = vpop.f32.mrf.mxu0
    %v586 = vadd.f32 %v146, %v585
    %587 = vdwg.mxu0
    %v588 = vxor.u32 %v586, 2147483648
    %v589 = vmul.f32 %v588, 1.442695
    %v590 = vpow.pop %v589
    %v591 = vadd.f32 %v590, 1.0
    %v592 = vrcp.pop %v591
    %v593 = vmul.f32 %v591, %v592
    %v594 = vsub.f32 1.0, %v593
    %v595 = vmul.f32 %v592, %v594
    %v596 = vadd.f32 %v592, %v595
    %vm597 = vweird.f32 %v591
    %vm598 = vweird.f32 %v592
    %vm599 = vmor %vm597, %vm598
    %v600 = vsel %vm599, %v592, %v596
    %v601 = vand.u32 2147483647, %v591
    %vm602 = vcmp.eq.f32.partialorder %v601, 8.507059e+37
    %v603 = vand.u32 %v591, 2147483648
    %v604 = vor.u32 1.1754944e-38, %v603
    %v605 = vsel %vm602, %v604, %v600
    %v606 = vmul.f32 1.0, %v605
    %v607 = vtanh.pop %v586
    %v608 = vmul.f32 %v606, %v478
    %610 = vrot.lane.b32.xlu0 %v607, 32
    %v611 = vpop.permute.xlu0 %610
    %v613 = vmul.f32 %v606, %v611
    %615 = vrot.lane.b32.xlu0 %v613, 32
    %v616 = vpop.permute.xlu0 %615
    %v618 = vadd.f32 %v608, %v616
    %v619 = vtanh.pop %v618
    %621 = vrot.lane.b32.xlu0 %v619, 32
    %v622 = vpop.permute.xlu0 %621
    %v624 = vmul.f32 %v606, %v622
    %v625 = vrot.slane %v553, 6
    %626 = vrot.lane.b32.xlu0 %v625, 64
    %v627 = vpop.permute.xlu0 %626
    %v628 = vsel %vm79, %v627, 0
    %630 = vmatpush.msra.mxu0 0.0
    %631 = vmatpush.msra.mxu0 0.0
    %632 = vmatpush.msra.mxu0 0.0
    %633 = vmatpush.msra.mxu0 0.0
    %634 = vmatpush.msra.mxu0 0.0
    %635 = vmatpush.msra.mxu0 0.0
    %636 = vmatpush.msra.mxu0 0.0
    %637 = vmatpush.msra.mxu0 0.0
    %638 = vmatpush.msra.mxu0 0.0
    %639 = vmatpush.msra.mxu0 0.0
    %640 = vmatpush.msra.mxu0 0.0
    %641 = vmatpush.msra.mxu0 0.0
    %642 = vmatpush.msra.mxu0 %v31
    %643 = vmatpush.msra.mxu0 %v30
    %644 = vmatpush.msra.mxu0 %v29
    %645 = vmatpush.msra.mxu0 %v28
    %646 = vmatmul.f32.gmra.mxu0 %v628
    %v647 = vpop.f32.mrf.mxu0
    %v648 = vadd.f32 0.0, %v647
    %649 = vdwg.mxu0
    %v650 = vadd.f32 %v77, %v648
    %v651 = vxor.u32 %v650, 2147483648
    %v652 = vmul.f32 %v651, 1.442695
    %v653 = vpow.pop %v652
    %v654 = vadd.f32 %v653, 1.0
    %v655 = vrcp.pop %v654
    %v656 = vmul.f32 %v654, %v655
    %v657 = vsub.f32 1.0, %v656
    %v658 = vmul.f32 %v655, %v657
    %v659 = vadd.f32 %v655, %v658
    %vm660 = vweird.f32 %v654
    %vm661 = vweird.f32 %v655
    %vm662 = vmor %vm660, %vm661
    %v663 = vsel %vm662, %v655, %v659
    %v664 = vand.u32 2147483647, %v654
    %vm665 = vcmp.eq.f32.partialorder %v664, 8.507059e+37
    %v666 = vand.u32 %v654, 2147483648
    %v667 = vor.u32 1.1754944e-38, %v666
    %v668 = vsel %vm665, %v667, %v663
    %v669 = vmul.f32 1.0, %v668
    %v670 = vtanh.pop %v650
    %v672 = vrot.slane %v547, 6
    %v674 = vmul.f32 %v669, %v672
    %676 = vrot.lane.b32.xlu0 %v670, 32
    %v677 = vpop.permute.xlu0 %676
    %v679 = vmul.f32 %v669, %v677
    %681 = vrot.lane.b32.xlu0 %v679, 32
    %v682 = vpop.permute.xlu0 %681
    %v684 = vadd.f32 %v674, %v682
    %v685 = vtanh.pop %v684
    %687 = vrot.lane.b32.xlu0 %v685, 32
    %v688 = vpop.permute.xlu0 %687
    %v690 = vmul.f32 %v669, %v688
    %692 = vrot.lane.b32.xlu0 %v690, 64
    %v693 = vpop.permute.xlu0 %692
    %696 = vrot.lane.b32.xlu0 %v624, 96
    %v697 = vpop.permute.xlu0 %696
    %v699 = vsel %vm79, %v693, %v697
    %v701 = vsel %vm147, %v699, 0
    %703 = vmatpush.msra.mxu0 0.0
    %704 = vmatpush.msra.mxu0 0.0
    %705 = vmatpush.msra.mxu0 0.0
    %706 = vmatpush.msra.mxu0 0.0
    %707 = vmatpush.msra.mxu0 0.0
    %708 = vmatpush.msra.mxu0 0.0
    %709 = vmatpush.msra.mxu0 0.0
    %710 = vmatpush.msra.mxu0 0.0
    %711 = vmatpush.msra.mxu0 %v40
    %712 = vmatpush.msra.mxu0 %v39
    %713 = vmatpush.msra.mxu0 %v38
    %714 = vmatpush.msra.mxu0 %v37
    %715 = vmatpush.msra.mxu0 %v36
    %716 = vmatpush.msra.mxu0 %v35
    %717 = vmatpush.msra.mxu0 %v34
    %718 = vmatpush.msra.mxu0 %v33
    %719 = vmatmul.f32.gmra.mxu0 %v701
    %v720 = vpop.f32.mrf.mxu0
    %v721 = vadd.f32 %v146, %v720
    %722 = vdwg.mxu0
    %v723 = vxor.u32 %v721, 2147483648
    %v724 = vmul.f32 %v723, 1.442695
    %v725 = vpow.pop %v724
    %v726 = vadd.f32 %v725, 1.0
    %v727 = vrcp.pop %v726
    %v728 = vmul.f32 %v726, %v727
    %v729 = vsub.f32 1.0, %v728
    %v730 = vmul.f32 %v727, %v729
    %v731 = vadd.f32 %v727, %v730
    %vm732 = vweird.f32 %v726
    %vm733 = vweird.f32 %v727
    %vm734 = vmor %vm732, %vm733
    %v735 = vsel %vm734, %v727, %v731
    %v736 = vand.u32 2147483647, %v726
    %vm737 = vcmp.eq.f32.partialorder %v736, 8.507059e+37
    %v738 = vand.u32 %v726, 2147483648
    %v739 = vor.u32 1.1754944e-38, %v738
    %v740 = vsel %vm737, %v739, %v735
    %v741 = vmul.f32 1.0, %v740
    %v742 = vtanh.pop %v721
    %v743 = vmul.f32 %v741, %v618
    %745 = vrot.lane.b32.xlu0 %v742, 32
    %v746 = vpop.permute.xlu0 %745
    %v748 = vmul.f32 %v741, %v746
    %750 = vrot.lane.b32.xlu0 %v748, 32
    %v751 = vpop.permute.xlu0 %750
    %v753 = vadd.f32 %v743, %v751
    %v754 = vtanh.pop %v753
    %756 = vrot.lane.b32.xlu0 %v754, 32
    %v757 = vpop.permute.xlu0 %756
    %v759 = vmul.f32 %v741, %v757
    %v760 = vsel %vm79, %v693, 0
    %762 = vmatpush.msra.mxu0 0.0
    %763 = vmatpush.msra.mxu0 0.0
    %764 = vmatpush.msra.mxu0 0.0
    %765 = vmatpush.msra.mxu0 0.0
    %766 = vmatpush.msra.mxu0 0.0
    %767 = vmatpush.msra.mxu0 0.0
    %768 = vmatpush.msra.mxu0 0.0
    %769 = vmatpush.msra.mxu0 0.0
    %770 = vmatpush.msra.mxu0 0.0
    %771 = vmatpush.msra.mxu0 0.0
    %772 = vmatpush.msra.mxu0 0.0
    %773 = vmatpush.msra.mxu0 0.0
    %774 = vmatpush.msra.mxu0 %v31
    %775 = vmatpush.msra.mxu0 %v30
    %776 = vmatpush.msra.mxu0 %v29
    %777 = vmatpush.msra.mxu0 %v28
    %778 = vmatmul.f32.gmra.mxu0 %v760
    %v779 = vpop.f32.mrf.mxu0
    %v780 = vadd.f32 0.0, %v779
    %781 = vdwg.mxu0
    %v783 = vrot.slane %v780, 6
    %v785 = vadd.f32 %v77, %v783
    %v786 = vxor.u32 %v785, 2147483648
    %v787 = vmul.f32 %v786, 1.442695
    %v788 = vpow.pop %v787
    %v789 = vadd.f32 %v788, 1.0
    %v790 = vrcp.pop %v789
    %v791 = vmul.f32 %v789, %v790
    %v792 = vsub.f32 1.0, %v791
    %v793 = vmul.f32 %v790, %v792
    %v794 = vadd.f32 %v790, %v793
    %vm795 = vweird.f32 %v789
    %vm796 = vweird.f32 %v790
    %vm797 = vmor %vm795, %vm796
    %v798 = vsel %vm797, %v790, %v794
    %v799 = vand.u32 2147483647, %v789
    %vm800 = vcmp.eq.f32.partialorder %v799, 8.507059e+37
    %v801 = vand.u32 %v789, 2147483648
    %v802 = vor.u32 1.1754944e-38, %v801
    %v803 = vsel %vm800, %v802, %v798
    %v804 = vmul.f32 1.0, %v803
    %v805 = vtanh.pop %v785
    %v807 = vrot.slane %v684, 6
    %v809 = vmul.f32 %v804, %v807
    %811 = vrot.lane.b32.xlu0 %v805, 32
    %v812 = vpop.permute.xlu0 %811
    %v814 = vmul.f32 %v804, %v812
    %816 = vrot.lane.b32.xlu0 %v814, 32
    %v817 = vpop.permute.xlu0 %816
    %v819 = vadd.f32 %v809, %v817
    %v820 = vtanh.pop %v819
    %822 = vrot.lane.b32.xlu0 %v820, 32
    %v823 = vpop.permute.xlu0 %822
    %v825 = vmul.f32 %v804, %v823
    %827 = vrot.lane.b32.xlu0 %v825, 64
    %v828 = vpop.permute.xlu0 %827
    %v831 = vrot.slane %v759, 6
    %832 = vrot.lane.b32.xlu0 %v831, 96
    %v833 = vpop.permute.xlu0 %832
    %v835 = vsel %vm79, %v828, %v833
    %v837 = vrot.slane %v835, 2
    %v838 = vsel %vm147, %v837, 0
    %840 = vmatpush.msra.mxu0 0.0
    %841 = vmatpush.msra.mxu0 0.0
    %842 = vmatpush.msra.mxu0 0.0
    %843 = vmatpush.msra.mxu0 0.0
    %844 = vmatpush.msra.mxu0 0.0
    %845 = vmatpush.msra.mxu0 0.0
    %846 = vmatpush.msra.mxu0 0.0
    %847 = vmatpush.msra.mxu0 0.0
    %848 = vmatpush.msra.mxu0 %v40
    %849 = vmatpush.msra.mxu0 %v39
    %850 = vmatpush.msra.mxu0 %v38
    %851 = vmatpush.msra.mxu0 %v37
    %852 = vmatpush.msra.mxu0 %v36
    %853 = vmatpush.msra.mxu0 %v35
    %854 = vmatpush.msra.mxu0 %v34
    %855 = vmatpush.msra.mxu0 %v33
    %856 = vmatmul.f32.gmra.mxu0 %v838
    %v857 = vpop.f32.mrf.mxu0
    %v858 = vadd.f32 %v146, %v857
    %859 = vdwg.mxu0
    %v860 = vxor.u32 %v858, 2147483648
    %v861 = vmul.f32 %v860, 1.442695
    %v862 = vpow.pop %v861
    %v863 = vadd.f32 %v862, 1.0
    %v864 = vrcp.pop %v863
    %v865 = vmul.f32 %v863, %v864
    %v866 = vsub.f32 1.0, %v865
    %v867 = vmul.f32 %v864, %v866
    %v868 = vadd.f32 %v864, %v867
    %vm869 = vweird.f32 %v863
    %vm870 = vweird.f32 %v864
    %vm871 = vmor %vm869, %vm870
    %v872 = vsel %vm871, %v864, %v868
    %v873 = vand.u32 2147483647, %v863
    %vm874 = vcmp.eq.f32.partialorder %v873, 8.507059e+37
    %v875 = vand.u32 %v863, 2147483648
    %v876 = vor.u32 1.1754944e-38, %v875
    %v877 = vsel %vm874, %v876, %v872
    %v878 = vmul.f32 1.0, %v877
    %v879 = vtanh.pop %v858
    %v880 = vmul.f32 %v878, %v753
    %882 = vrot.lane.b32.xlu0 %v879, 32
    %v883 = vpop.permute.xlu0 %882
    %v885 = vmul.f32 %v878, %v883
    %887 = vrot.lane.b32.xlu0 %v885, 32
    %v888 = vpop.permute.xlu0 %887
    %v890 = vadd.f32 %v880, %v888
    %v891 = vtanh.pop %v890
    %893 = vrot.lane.b32.xlu0 %v891, 32
    %v894 = vpop.permute.xlu0 %893
    %v896 = vmul.f32 %v878, %v894
    %v897 = vrot.slane %v825, 2
    %898 = vrot.lane.b32.xlu0 %v897, 64
    %v899 = vpop.permute.xlu0 %898
    %v900 = vsel %vm79, %v899, 0
    %902 = vmatpush.msra.mxu0 0.0
    %903 = vmatpush.msra.mxu0 0.0
    %904 = vmatpush.msra.mxu0 0.0
    %905 = vmatpush.msra.mxu0 0.0
    %906 = vmatpush.msra.mxu0 0.0
    %907 = vmatpush.msra.mxu0 0.0
    %908 = vmatpush.msra.mxu0 0.0
    %909 = vmatpush.msra.mxu0 0.0
    %910 = vmatpush.msra.mxu0 0.0
    %911 = vmatpush.msra.mxu0 0.0
    %912 = vmatpush.msra.mxu0 0.0
    %913 = vmatpush.msra.mxu0 0.0
    %914 = vmatpush.msra.mxu0 %v31
    %915 = vmatpush.msra.mxu0 %v30
    %916 = vmatpush.msra.mxu0 %v29
    %917 = vmatpush.msra.mxu0 %v28
    %918 = vmatmul.f32.gmra.mxu0 %v900
    %v919 = vpop.f32.mrf.mxu0
    %v920 = vadd.f32 0.0, %v919
    %921 = vdwg.mxu0
    %v923 = vrot.slane %v920, 4
    %v925 = vadd.f32 %v77, %v923
    %v926 = vxor.u32 %v925, 2147483648
    %v927 = vmul.f32 %v926, 1.442695
    %v928 = vpow.pop %v927
    %v929 = vadd.f32 %v928, 1.0
    %v930 = vrcp.pop %v929
    %v931 = vmul.f32 %v929, %v930
    %v932 = vsub.f32 1.0, %v931
    %v933 = vmul.f32 %v930, %v932
    %v934 = vadd.f32 %v930, %v933
    %vm935 = vweird.f32 %v929
    %vm936 = vweird.f32 %v930
    %vm937 = vmor %vm935, %vm936
    %v938 = vsel %vm937, %v930, %v934
    %v939 = vand.u32 2147483647, %v929
    %vm940 = vcmp.eq.f32.partialorder %v939, 8.507059e+37
    %v941 = vand.u32 %v929, 2147483648
    %v942 = vor.u32 1.1754944e-38, %v941
    %v943 = vsel %vm940, %v942, %v938
    %v944 = vmul.f32 1.0, %v943
    %v945 = vtanh.pop %v925
    %v947 = vrot.slane %v819, 6
    %v949 = vmul.f32 %v944, %v947
    %951 = vrot.lane.b32.xlu0 %v945, 32
    %v952 = vpop.permute.xlu0 %951
    %v954 = vmul.f32 %v944, %v952
    %956 = vrot.lane.b32.xlu0 %v954, 32
    %v957 = vpop.permute.xlu0 %956
    %v959 = vadd.f32 %v949, %v957
    %v960 = vtanh.pop %v959
    %962 = vrot.lane.b32.xlu0 %v960, 32
    %v963 = vpop.permute.xlu0 %962
    %v965 = vmul.f32 %v944, %v963
    %967 = vrot.lane.b32.xlu0 %v965, 64
    %v968 = vpop.permute.xlu0 %967
    %v971 = vrot.slane %v896, 4
    %972 = vrot.lane.b32.xlu0 %v971, 96
    %v973 = vpop.permute.xlu0 %972
    %v975 = vsel %vm79, %v968, %v973
    %v977 = vrot.slane %v975, 4
    %v978 = vsel %vm147, %v977, 0
    %980 = vmatpush.msra.mxu0 0.0
    %981 = vmatpush.msra.mxu0 0.0
    %982 = vmatpush.msra.mxu0 0.0
    %983 = vmatpush.msra.mxu0 0.0
    %984 = vmatpush.msra.mxu0 0.0
    %985 = vmatpush.msra.mxu0 0.0
    %986 = vmatpush.msra.mxu0 0.0
    %987 = vmatpush.msra.mxu0 0.0
    %988 = vmatpush.msra.mxu0 %v40
    %989 = vmatpush.msra.mxu0 %v39
    %990 = vmatpush.msra.mxu0 %v38
    %991 = vmatpush.msra.mxu0 %v37
    %992 = vmatpush.msra.mxu0 %v36
    %993 = vmatpush.msra.mxu0 %v35
    %994 = vmatpush.msra.mxu0 %v34
    %995 = vmatpush.msra.mxu0 %v33
    %996 = vmatmul.f32.gmra.mxu0 %v978
    %v997 = vpop.f32.mrf.mxu0
    %v998 = vadd.f32 %v146, %v997
    %999 = vdwg.mxu0
    %v1000 = vxor.u32 %v998, 2147483648
    %v1001 = vmul.f32 %v1000, 1.442695
    %v1002 = vpow.pop %v1001
    %v1003 = vadd.f32 %v1002, 1.0
    %v1004 = vrcp.pop %v1003
    %v1005 = vmul.f32 %v1003, %v1004
    %v1006 = vsub.f32 1.0, %v1005
    %v1007 = vmul.f32 %v1004, %v1006
    %v1008 = vadd.f32 %v1004, %v1007
    %vm1009 = vweird.f32 %v1003
    %vm1010 = vweird.f32 %v1004
    %vm1011 = vmor %vm1009, %vm1010
    %v1012 = vsel %vm1011, %v1004, %v1008
    %v1013 = vand.u32 2147483647, %v1003
    %vm1014 = vcmp.eq.f32.partialorder %v1013, 8.507059e+37
    %v1015 = vand.u32 %v1003, 2147483648
    %v1016 = vor.u32 1.1754944e-38, %v1015
    %v1017 = vsel %vm1014, %v1016, %v1012
    %v1018 = vmul.f32 1.0, %v1017
    %v1019 = vtanh.pop %v998
    %v1020 = vmul.f32 %v1018, %v890
    %1022 = vrot.lane.b32.xlu0 %v1019, 32
    %v1023 = vpop.permute.xlu0 %1022
    %v1025 = vmul.f32 %v1018, %v1023
    %1027 = vrot.lane.b32.xlu0 %v1025, 32
    %v1028 = vpop.permute.xlu0 %1027
    %v1030 = vadd.f32 %v1020, %v1028
    %v1031 = vtanh.pop %v1030
    %1033 = vrot.lane.b32.xlu0 %v1031, 32
    %v1034 = vpop.permute.xlu0 %1033
    %v1036 = vmul.f32 %v1018, %v1034
    %v1037 = vrot.slane %v965, 4
    %1038 = vrot.lane.b32.xlu0 %v1037, 64
    %v1039 = vpop.permute.xlu0 %1038
    %v1040 = vsel %vm79, %v1039, 0
    %1042 = vmatpush.msra.mxu0 0.0
    %1043 = vmatpush.msra.mxu0 0.0
    %1044 = vmatpush.msra.mxu0 0.0
    %1045 = vmatpush.msra.mxu0 0.0
    %1046 = vmatpush.msra.mxu0 0.0
    %1047 = vmatpush.msra.mxu0 0.0
    %1048 = vmatpush.msra.mxu0 0.0
    %1049 = vmatpush.msra.mxu0 0.0
    %1050 = vmatpush.msra.mxu0 0.0
    %1051 = vmatpush.msra.mxu0 0.0
    %1052 = vmatpush.msra.mxu0 0.0
    %1053 = vmatpush.msra.mxu0 0.0
    %1054 = vmatpush.msra.mxu0 %v31
    %1055 = vmatpush.msra.mxu0 %v30
    %1056 = vmatpush.msra.mxu0 %v29
    %1057 = vmatpush.msra.mxu0 %v28
    %1058 = vmatmul.f32.gmra.mxu0 %v1040
    %v1059 = vpop.f32.mrf.mxu0
    %v1060 = vadd.f32 0.0, %v1059
    %1061 = vdwg.mxu0
    %v1063 = vrot.slane %v1060, 2
    %v1065 = vadd.f32 %v77, %v1063
    %v1066 = vxor.u32 %v1065, 2147483648
    %v1067 = vmul.f32 %v1066, 1.442695
    %v1068 = vpow.pop %v1067
    %v1069 = vadd.f32 %v1068, 1.0
    %v1070 = vrcp.pop %v1069
    %v1071 = vmul.f32 %v1069, %v1070
    %v1072 = vsub.f32 1.0, %v1071
    %v1073 = vmul.f32 %v1070, %v1072
    %v1074 = vadd.f32 %v1070, %v1073
    %vm1075 = vweird.f32 %v1069
    %vm1076 = vweird.f32 %v1070
    %vm1077 = vmor %vm1075, %vm1076
    %v1078 = vsel %vm1077, %v1070, %v1074
    %v1079 = vand.u32 2147483647, %v1069
    %vm1080 = vcmp.eq.f32.partialorder %v1079, 8.507059e+37
    %v1081 = vand.u32 %v1069, 2147483648
    %v1082 = vor.u32 1.1754944e-38, %v1081
    %v1083 = vsel %vm1080, %v1082, %v1078
    %v1084 = vmul.f32 1.0, %v1083
    %v1085 = vtanh.pop %v1065
    %v1087 = vrot.slane %v959, 6
    %v1089 = vmul.f32 %v1084, %v1087
    %1091 = vrot.lane.b32.xlu0 %v1085, 32
    %v1092 = vpop.permute.xlu0 %1091
    %v1094 = vmul.f32 %v1084, %v1092
    %1096 = vrot.lane.b32.xlu0 %v1094, 32
    %v1097 = vpop.permute.xlu0 %1096
    %v1099 = vadd.f32 %v1089, %v1097
    %v1100 = vtanh.pop %v1099
    %1102 = vrot.lane.b32.xlu0 %v1100, 32
    %v1103 = vpop.permute.xlu0 %1102
    %v1105 = vmul.f32 %v1084, %v1103
    %1107 = vrot.lane.b32.xlu0 %v1105, 64
    %v1108 = vpop.permute.xlu0 %1107
    %v1111 = vrot.slane %v1036, 2
    %1112 = vrot.lane.b32.xlu0 %v1111, 96
    %v1113 = vpop.permute.xlu0 %1112
    %v1115 = vsel %vm79, %v1108, %v1113
    %v1117 = vrot.slane %v1115, 6
    %v1118 = vsel %vm147, %v1117, 0
    %1120 = vmatpush.msra.mxu0 0.0
    %1121 = vmatpush.msra.mxu0 0.0
    %1122 = vmatpush.msra.mxu0 0.0
    %1123 = vmatpush.msra.mxu0 0.0
    %1124 = vmatpush.msra.mxu0 0.0
    %1125 = vmatpush.msra.mxu0 0.0
    %1126 = vmatpush.msra.mxu0 0.0
    %1127 = vmatpush.msra.mxu0 0.0
    %1128 = vmatpush.msra.mxu0 %v40
    %1129 = vmatpush.msra.mxu0 %v39
    %1130 = vmatpush.msra.mxu0 %v38
    %1131 = vmatpush.msra.mxu0 %v37
    %1132 = vmatpush.msra.mxu0 %v36
    %1133 = vmatpush.msra.mxu0 %v35
    %1134 = vmatpush.msra.mxu0 %v34
    %1135 = vmatpush.msra.mxu0 %v33
    %1136 = vmatmul.f32.gmra.mxu0 %v1118
    %v1137 = vpop.f32.mrf.mxu0
    %v1138 = vadd.f32 %v146, %v1137
    %1139 = vdwg.mxu0
    %v1140 = vxor.u32 %v1138, 2147483648
    %v1141 = vmul.f32 %v1140, 1.442695
    %v1142 = vpow.pop %v1141
    %v1143 = vadd.f32 %v1142, 1.0
    %v1144 = vrcp.pop %v1143
    %v1145 = vmul.f32 %v1143, %v1144
    %v1146 = vsub.f32 1.0, %v1145
    %v1147 = vmul.f32 %v1144, %v1146
    %v1148 = vadd.f32 %v1144, %v1147
    %vm1149 = vweird.f32 %v1143
    %vm1150 = vweird.f32 %v1144
    %vm1151 = vmor %vm1149, %vm1150
    %v1152 = vsel %vm1151, %v1144, %v1148
    %v1153 = vand.u32 2147483647, %v1143
    %vm1154 = vcmp.eq.f32.partialorder %v1153, 8.507059e+37
    %v1155 = vand.u32 %v1143, 2147483648
    %v1156 = vor.u32 1.1754944e-38, %v1155
    %v1157 = vsel %vm1154, %v1156, %v1152
    %v1158 = vmul.f32 1.0, %v1157
    %v1159 = vtanh.pop %v1138
    %v1160 = vmul.f32 %v1158, %v1030
    %1162 = vrot.lane.b32.xlu0 %v1159, 32
    %v1163 = vpop.permute.xlu0 %1162
    %v1165 = vmul.f32 %v1158, %v1163
    %1167 = vrot.lane.b32.xlu0 %v1165, 32
    %v1168 = vpop.permute.xlu0 %1167
    %v1170 = vadd.f32 %v1160, %v1168
    %v1171 = vtanh.pop %v1170
    %1173 = vrot.lane.b32.xlu0 %v1171, 32
    %v1174 = vpop.permute.xlu0 %1173
    %v1176 = vmul.f32 %v1158, %v1174
    %v1177 = vrot.slane %v344, 6
    %v1179 = vrot.slane %v484, 4
    %v1181 = vrot.slane %v624, 2
    %v1183 = vrot.slane %v896, 6
    %v1185 = vrot.slane %v1036, 4
    %v1188 = vrot.slane %v1176, 2
    %vm1190 = vcmask 1041408
    %v1191 = vsel %vm1190, %v207, %v1177
    %v1192 = vsel %vm52, %v1191, %v1179
    %vm1193 = vcmask 1045504
    %v1194 = vsel %vm1193, %v1192, %v1181
    %v1195 = vsel %vm1190, %v759, %v1183
    %v1196 = vsel %vm52, %v1195, %v1185
    %v1197 = vsel %vm1193, %v1196, %v1188
    %v1198 = vld [vmem:[#allocation2 + $0x78] sm:$0xff]
    %v1199 = vld [vmem:[#allocation2 + $0x80] sm:$0xff]
    %v1200 = vld [vmem:[#allocation2 + $0x88] sm:$0xff]
    %v1201 = vld [vmem:[#allocation2 + $0x90] sm:$0xff]
    %v1202 = vld [vmem:[#allocation2 + $0x98] sm:$0x1]
    %v1203 = vld [vmem:[#allocation2 + $0xa0] sm:$0x1]
    %1206 = vrot.lane.b32.xlu0 %v1194, 64
    %v1207 = vpop.permute.xlu0 %1206
    %1208 = vrot.lane.b32.xlu0 %v1197, 64
    %v1209 = vpop.permute.xlu0 %1208
    %v1210 = vsel %vm79, %v1207, 0
    %v1212 = vsel %vm79, %v1209, 0
    %1214 = vmatpush.msra.mxu0 0.0
    %1215 = vmatpush.msra.mxu0 0.0
    %1216 = vmatpush.msra.mxu0 0.0
    %1217 = vmatpush.msra.mxu0 0.0
    %1218 = vmatpush.msra.mxu0 0.0
    %1219 = vmatpush.msra.mxu0 0.0
    %1220 = vmatpush.msra.mxu0 0.0
    %1221 = vmatpush.msra.mxu0 0.0
    %1222 = vmatpush.msra.mxu0 0.0
    %1223 = vmatpush.msra.mxu0 0.0
    %1224 = vmatpush.msra.mxu0 0.0
    %1225 = vmatpush.msra.mxu0 0.0
    %1226 = vmatpush.msra.mxu0 %v1201
    %1227 = vmatpush.msra.mxu0 %v1200
    %1228 = vmatpush.msra.mxu0 %v1199
    %1229 = vmatpush.msra.mxu0 %v1198
    %1230 = vmatmul.f32.gmra.mxu0 %v1210
    %v1231 = vpop.f32.mrf.mxu0
    %v1232 = vadd.f32 0.0, %v1231
    %1233 = vmatmul.f32.gmra.mxu0 %v1212
    %v1234 = vpop.f32.mrf.mxu0
    %v1235 = vadd.f32 0.0, %v1234
    %1236 = vdwg.mxu0
    %v1237 = vperm.slane %v1202, 0
    %1239 = vrot.lane.b32.xlu0 %v1237, 32
    %v1240 = vpop.permute.xlu0 %1239
    %v1242 = vadd.f32 %v1235, %v1240
    %v1244 = vrot.slane %v1242, 6
    %v1246 = vrot.slane %v1242, 4
    %v1248 = vrot.slane %v1242, 2
    %v1250 = vsel %vm1190, %v1244, %v1246
    %v1251 = vsel %vm52, %v1250, %v1248
    %v1252 = vsel %vm1193, %v1251, %v1242
    %1254 = vrot.lane.b32.xlu0 %v1252, 96
    %v1255 = vpop.permute.xlu0 %1254
    %v1257 = vadd.f32 %v1232, %v1255
    %v1258 = vadd.f32 %v1235, %v1255
    %v1259 = vtanh.pop %v1257
    %v1260 = vtanh.pop %v1258
    %1261 = vrot.lane.b32.xlu0 %v1237, 64
    %v1262 = vpop.permute.xlu0 %1261
    %v1264 = vmul.f32 %v1259, %v1262
    %v1265 = vmul.f32 %v1260, %v1262
    %v1266 = vsel %vm79, %v1264, 0.0
    %1267 = vadd.xlane.f32.xlu0 %v1266
    %v1268 = vpop.xlane.xlu0 %1267
    %v1269 = vsel %vm79, %v1265, 0.0
    %1270 = vadd.xlane.f32.xlu0 %v1269
    %v1271 = vpop.xlane.xlu0 %1270
    %v1273 = vrot.slane %v1268, 2
    %v1275 = vrot.slane %v1268, 4
    %v1277 = vrot.slane %v1268, 6
    %v1280 = vrot.slane %v1271, 2
    %v1282 = vrot.slane %v1271, 4
    %v1284 = vrot.slane %v1271, 6
    %vm1286 = vcmask 7168
    %v1287 = vsel %vm1286, %v1268, %v1273
    %vm1288 = vcmask 15360
    %v1289 = vsel %vm1288, %v1287, %v1275
    %vm1290 = vcmask 23552
    %v1291 = vsel %vm1290, %v1289, %v1277
    %v1292 = vsel %vm45, %v1291, %v1271
    %vm1293 = vcmask 39936
    %v1294 = vsel %vm1293, %v1292, %v1280
    %vm1295 = vcmask 48128
    %v1296 = vsel %vm1295, %v1294, %v1282
    %vm1297 = vcmask 56320
    %v1298 = vsel %vm1297, %v1296, %v1284
    %vm1299 = vcmask 58368
    %v1300 = vsel %vm1299, %v1298, -inf
    %1301 = vmax.xlane.f32.xlu0 %v1300
    %v1302 = vpop.xlane.xlu0 %1301
    %v1303 = vsub.f32 %v1298, %v1302
    %v1304 = vmul.f32 %v1303, 1.442695
    %v1305 = vpow.pop %v1304
    %v1306 = vsel %vm1299, %v1305, 0.0
    %1307 = vadd.xlane.f32.xlu0 %v1306
    %v1308 = vpop.xlane.xlu0 %1307
    %v1309 = vrcp.pop %v1308
    %v1310 = vmul.f32 %v1305, %v1309
    %1312 = vset.pattern.permute.xlu0 0
    %1313 = vperm.xlu0 %1312, %v1310
    %v1314 = vpop.permute.xlu0 %1313
    %v1316 = vmul.f32 %v207, %v1314
    %1317 = vset.pattern.permute.xlu0 1
    %1318 = vperm.xlu0 %1317, %v1310
    %v1319 = vpop.permute.xlu0 %1318
    %v1321 = vmul.f32 %v344, %v1319
    %1322 = vset.pattern.permute.xlu0 2
    %1323 = vperm.xlu0 %1322, %v1310
    %v1324 = vpop.permute.xlu0 %1323
    %v1326 = vmul.f32 %v484, %v1324
    %1327 = vset.pattern.permute.xlu0 3
    %1328 = vperm.xlu0 %1327, %v1310
    %v1329 = vpop.permute.xlu0 %1328
    %v1331 = vmul.f32 %v624, %v1329
    %1332 = vset.pattern.permute.xlu0 4
    %1333 = vperm.xlu0 %1332, %v1310
    %v1334 = vpop.permute.xlu0 %1333
    %v1336 = vmul.f32 %v759, %v1334
    %1337 = vset.pattern.permute.xlu0 5
    %1338 = vperm.xlu0 %1337, %v1310
    %v1339 = vpop.permute.xlu0 %1338
    %v1341 = vmul.f32 %v896, %v1339
    %1342 = vset.pattern.permute.xlu0 6
    %1343 = vperm.xlu0 %1342, %v1310
    %v1344 = vpop.permute.xlu0 %1343
    %v1346 = vmul.f32 %v1036, %v1344
    %1347 = vset.pattern.permute.xlu0 7
    %1348 = vperm.xlu0 %1347, %v1310
    %v1349 = vpop.permute.xlu0 %1348
    %v1351 = vmul.f32 %v1176, %v1349
    %v1352 = vadd.f32 %v1316, %v1321
    %v1353 = vadd.f32 %v1326, %v1331
    %v1354 = vadd.f32 %v1336, %v1341
    %v1355 = vadd.f32 %v1346, %v1351
    %v1356 = vadd.f32 %v1352, %v1353
    %v1357 = vadd.f32 %v1354, %v1355
    %v1358 = vadd.f32 %v1356, %v1357
    %1360 = vrot.lane.b32.xlu0 %v1358, 64
    %v1361 = vpop.permute.xlu0 %1360
    %1366 = vrot.lane.b32.xlu0 %v1198, 32
    %v1367 = vpop.permute.xlu0 %1366
    %1368 = vrot.lane.b32.xlu0 %v1199, 32
    %v1369 = vpop.permute.xlu0 %1368
    %1370 = vrot.lane.b32.xlu0 %v1200, 32
    %v1371 = vpop.permute.xlu0 %1370
    %1372 = vrot.lane.b32.xlu0 %v1201, 32
    %v1373 = vpop.permute.xlu0 %1372
    %v1379 = vrot.slane %v1235, 6
    %1380 = vrot.lane.b32.xlu0 %v1379, 64
    %v1381 = vpop.permute.xlu0 %1380
    %v1383 = vsel %vm79, %v1361, 0
    %1385 = vmatpush.msra.mxu0 0.0
    %1386 = vmatpush.msra.mxu0 0.0
    %1387 = vmatpush.msra.mxu0 0.0
    %1388 = vmatpush.msra.mxu0 0.0
    %1389 = vmatpush.msra.mxu0 0.0
    %1390 = vmatpush.msra.mxu0 0.0
    %1391 = vmatpush.msra.mxu0 0.0
    %1392 = vmatpush.msra.mxu0 0.0
    %1393 = vmatpush.msra.mxu0 0.0
    %1394 = vmatpush.msra.mxu0 0.0
    %1395 = vmatpush.msra.mxu0 0.0
    %1396 = vmatpush.msra.mxu0 0.0
    %1397 = vmatpush.msra.mxu0 %v1373
    %1398 = vmatpush.msra.mxu0 %v1371
    %1399 = vmatpush.msra.mxu0 %v1369
    %1400 = vmatpush.msra.mxu0 %v1367
    %1401 = vmatmul.f32.gmra.mxu0 %v1383
    %v1402 = vpop.f32.mrf.mxu0
    %v1403 = vadd.f32 %v1381, %v1402
    %1404 = vdwg.mxu0
    %1405 = vrot.lane.b32.xlu0 %v1237, 96
    %v1406 = vpop.permute.xlu0 %1405
    %v1408 = vadd.f32 %v1403, %v1406
    %v1409 = vmax.f32 %v1408, 0.0
    %v1410 = vmul.f32 %v1409, %v1240
    %vm1411 = vcmask 254976
    %v1412 = vsel %vm1411, %v1410, 0.0
    %1413 = vadd.xlane.f32.xlu0 %v1412
    %v1414 = vpop.xlane.xlu0 %1413
    %v1415 = vperm.slane %v1203, 0
    %v1416 = vadd.f32 %v1414, %v1415
    %vm1417 = vcmask 1024
    %1418 = vst.msk [vmem:[%s2] sm:$0x3] %vm1417, %v1416
    // Predicated region
    $region14: #{lstm_attention_forward.1} parent=1 // pred_check
      _
    $region15: #{lstm_attention_forward.1} parent=1 // pred_check_branch
      %1420 = sbr.rel (0) target = $region17
    $region16: #{lstm_attention_forward.1} parent=1 // pred_region
      _
    $region17: #{lstm_attention_forward.1} parent=1 // pred_fallthru
      _
    // Predicated region
    $region18: #{lstm_attention_forward.1} parent=1 // pred_check
      _
    $region19: #{lstm_attention_forward.1} parent=1 // pred_check_branch
      %1422 = sbr.rel (0) target = $region21
    $region20: #{lstm_attention_forward.1} parent=1 // pred_region
      _
    $region21: #{lstm_attention_forward.1} parent=1 // pred_fallthru
      _
    %1423 = vsyncpa [#allocation3], 1

</llo_original>
